<compile_context>
chip_gen: v5e
topology: v5e:2x2
jax: 0.10.0
libtpu: 0.0.40
codegen_flags: <defaults>
</compile_context>

<pallas_src>
import jax
import jax.numpy as jnp
from jax.experimental import pallas as pl
from jax.experimental.pallas import tpu as pltpu


def _vq_kernel(x_ref, w_ref, w2_ref,
               q_ref, idx_ref, ohsum_ref, sqerr_ref):
    """One (tn, D) row tile: nearest-codebook lookup + partial reductions."""
    inner = pl.program_id(1)

    x = x_ref[...]                      # (tn, D)  float32 inputs
    w = w_ref[...]                      # (Kp, D)  float32 codebook (zero-padded rows)
    w2 = w2_ref[...]                    # (1, Kp)  hoisted ||e_k||^2 (huge for pad rows)
    tn = x.shape[0]
    kp = w.shape[0]
    d = x.shape[1]

    # argmin_k ||x - e_k||^2 == argmin_k (||e_k||^2 - 2 x.e_k); the row-constant
    # ||x||^2 term is dropped (saves a (tn, D) multiply + cross-lane reduce).
    xw = jnp.dot(x, w.T, preferred_element_type=jnp.float32)     # (tn, Kp) on MXU
    dist = w2 - 2.0 * xw
    idx = jnp.argmin(dist, axis=1)                                # (tn,) int32

    # one-hot encodings; quantized = encodings @ codebook is an exact row gather
    # (one 1.0 per row), so it reproduces the torch codebook rows bit-exactly.
    onehot = (idx[:, None] ==
              jax.lax.broadcasted_iota(jnp.int32, (tn, kp), 1)).astype(jnp.float32)
    q = jnp.dot(onehot, w, preferred_element_type=jnp.float32)    # (tn, D)

    # forward value of `inputs + (quantized - inputs).detach()` is just `quantized`
    q_ref[...] = q.astype(q_ref.dtype)
    idx_ref[...] = idx[:, None].astype(jnp.int32)

    @pl.when(inner == 0)
    def _():
        ohsum_ref[...] = jnp.zeros_like(ohsum_ref)
        sqerr_ref[...] = jnp.zeros_like(sqerr_ref)

    # per-outer-slot partial reductions, accumulated across the inner grid axis
    diff = q - x
    ohsum_ref[...] += jnp.sum(onehot, axis=0).reshape(1, 1, kp)
    sqerr_ref[...] += jnp.sum(diff * diff, axis=0).reshape(1, 1, d)


def _pick_row_tile(n, tn_max):
    """Largest row tile <= tn_max that divides n (multiple of 8 for clean tiling)."""
    if n <= tn_max:
        return n
    t = (tn_max // 8) * 8
    while t >= 8:
        if n % t == 0:
            return t
        t -= 8
    raise ValueError(
        f"flattened row count {n} has no multiple-of-8 divisor <= {tn_max}")


def vector_quantizer(inputs, embedding_weight, commitment_cost=0.25,
                     row_tile=1024, vmem_limit_bytes=32 * 1024 * 1024):
    """Forward pass of VectorQuantizer.

    inputs: (..., D) float32 with D == embedding_dim.
    embedding_weight: (K, D) float32 codebook.
    Returns (quantized, vq_loss, encoding_indices, perplexity).
    """
    k, d = embedding_weight.shape
    orig_shape = inputs.shape
    assert orig_shape[-1] == d, "last input dim must equal embedding_dim"
    flat = inputs.reshape(-1, d).astype(jnp.float32)
    n = flat.shape[0]

    # --- row tiling: bigger tiles amortize per-grid-step overhead -----------
    tn = _pick_row_tile(n, row_tile)
    n_tiles = n // tn
    # Split row tiles across the two TensorCores on v7x via a "parallel" outer
    # axis; harmless (single outer step) on single-core v5e / v6e.
    n_outer = 2 if (n_tiles % 2 == 0) else 1
    n_inner = n_tiles // n_outer

    # --- pad codebook K up to a lane-full multiple of 128 --------------------
    # (keep tn / K_pad such that the live set stays well under v7x's 64 MiB VMEM;
    #  at the defaults it is only a few MiB.)
    k_pad = max(128, ((k + 127) // 128) * 128)
    w_pad = jnp.zeros((k_pad, d), jnp.float32).at[:k, :].set(
        embedding_weight.astype(jnp.float32))
    # hoisted, grid-invariant ||e_k||^2; pad rows get a huge norm -> never selected
    w2 = jnp.sum(w_pad * w_pad, axis=1)
    w2 = jnp.where(jnp.arange(k_pad) < k, w2, jnp.float32(1e30)).reshape(1, k_pad)

    grid = (n_outer, n_inner)

    q, idx, ohsum_parts, sqerr_parts = pl.pallas_call(
        _vq_kernel,
        out_shape=(
            jax.ShapeDtypeStruct((n, d), jnp.float32),                # quantized (flat)
            jax.ShapeDtypeStruct((n, 1), jnp.int32),                  # encoding indices
            jax.ShapeDtypeStruct((n_outer, 1, k_pad), jnp.float32),   # partial one-hot sums
            jax.ShapeDtypeStruct((n_outer, 1, d), jnp.float32),       # partial sq-err sums
        ),
        grid_spec=pltpu.PrefetchScalarGridSpec(
            num_scalar_prefetch=0,
            grid=grid,
            in_specs=[
                pl.BlockSpec((tn, d), lambda o, i: (o * n_inner + i, 0)),  # row tile
                pl.BlockSpec((k_pad, d), lambda o, i: (0, 0)),             # codebook (resident)
                pl.BlockSpec((1, k_pad), lambda o, i: (0, 0)),             # ||e||^2 (resident)
            ],
            out_specs=[
                pl.BlockSpec((tn, d), lambda o, i: (o * n_inner + i, 0)),
                pl.BlockSpec((tn, 1), lambda o, i: (o * n_inner + i, 0)),
                pl.BlockSpec((1, 1, k_pad), lambda o, i: (o, 0, 0)),       # per-core accum
                pl.BlockSpec((1, 1, d), lambda o, i: (o, 0, 0)),           # per-core accum
            ],
        ),
        compiler_params=pltpu.CompilerParams(
            dimension_semantics=("parallel", "arbitrary"),
            vmem_limit_bytes=vmem_limit_bytes),
    )(flat, w_pad, w2)

    # --- cheap scalar epilogue in JAX ----------------------------------------
    ohsum = jnp.sum(ohsum_parts, axis=0).reshape(k_pad)[:k]   # pad entries are 0
    avg_probs = ohsum / jnp.float32(n)
    perplexity = jnp.exp(-jnp.sum(avg_probs * jnp.log(avg_probs + 1e-10)))

    sqerr = jnp.sum(sqerr_parts)
    mse = sqerr / jnp.float32(n * d)
    # q_latent_loss == e_latent_loss in the forward value (detach only affects grads)
    vq_loss = (1.0 + commitment_cost) * mse

    quantized = q.reshape(orig_shape)
    encoding_indices = idx.reshape(-1)    # NOTE: int32 (torch returns int64)
    return quantized, vq_loss, encoding_indices, perplexity


def _reference(inputs, w, commitment_cost):
    """Pure-JAX reference (matches the torch forward outputs).

    ||x||^2 is constant per row, so it cannot change the argmin; it is dropped
    here as well so the reference stays numerically aligned with the kernel's
    distance formula (near-ties are otherwise float-order ambiguous).
    """
    d = w.shape[1]
    flat = inputs.reshape(-1, d)
    dist = jnp.sum(w ** 2, axis=1) - 2.0 * flat @ w.T
    idx = jnp.argmin(dist, axis=1)
    enc = jax.nn.one_hot(idx, w.shape[0], dtype=jnp.float32)
    q = (enc @ w).reshape(inputs.shape)
    mse = jnp.mean((q - inputs) ** 2)
    vq_loss = (1.0 + commitment_cost) * mse
    avg = jnp.mean(enc, axis=0)
    perp = jnp.exp(-jnp.sum(avg * jnp.log(avg + 1e-10)))
    return q, vq_loss, idx.astype(jnp.int32), perp


if __name__ == "__main__":
    num_embeddings = 64
    embedding_dim = 32
    commitment_cost = 0.25

    key = jax.random.PRNGKey(0)
    k_w, k_x = jax.random.split(key)

    # nn.Embedding(num_embeddings, embedding_dim).weight.uniform_(-1/K, 1/K)
    embedding_weight = jax.random.uniform(
        k_w, (num_embeddings, embedding_dim),
        minval=-1.0 / num_embeddings, maxval=1.0 / num_embeddings,
        dtype=jnp.float32)

    # (B, H, W, D) channels-last, D == embedding_dim
    x = jax.random.normal(k_x, (2, 16, 16, embedding_dim), dtype=jnp.float32)

    q, vq_loss, indices, perplexity = jax.block_until_ready(
        vector_quantizer(x, embedding_weight, commitment_cost))

    q_r, loss_r, idx_r, perp_r = _reference(x, embedding_weight, commitment_cost)
    n = x.shape[0] * x.shape[1] * x.shape[2]
    assert q.shape == x.shape and indices.shape == (n,)
    assert jnp.allclose(q, q_r, atol=1e-5)
    assert jnp.all(indices == idx_r)
    assert jnp.allclose(vq_loss, loss_r, rtol=1e-4, atol=1e-5)
    assert jnp.allclose(perplexity, perp_r, rtol=1e-4, atol=1e-4)

    # sanity check against the literal torch distance formula (includes ||x||^2):
    flat = x.reshape(-1, embedding_dim)
    dist_full = (jnp.sum(flat ** 2, axis=1, keepdims=True)
                 + jnp.sum(embedding_weight ** 2, axis=1)
                 - 2.0 * flat @ embedding_weight.T)
    idx_full = jnp.argmin(dist_full, axis=1)
    assert jnp.mean((indices == idx_full).astype(jnp.float32)) > 0.99

    print("KERNEL_OK")
</pallas_src>

<mosaic_0001>
module attributes {stable_mosaic.version = 11 : i64} {
  func.func @_vq_kernel(%arg0: i32, %arg1: i32, %arg2: memref<512x32xf32, #tpu.memory_space<vmem>>, %arg3: memref<128x32xf32, #tpu.memory_space<vmem>>, %arg4: memref<1x128xf32, #tpu.memory_space<vmem>>, %arg5: memref<512x32xf32, #tpu.memory_space<vmem>>, %arg6: memref<512x1xi32, #tpu.memory_space<vmem>>, %arg7: memref<1x1x128xf32, #tpu.memory_space<vmem>>, %arg8: memref<1x1x32xf32, #tpu.memory_space<vmem>>) attributes {dimension_semantics = [#tpu.dimension_semantics<parallel>, #tpu.dimension_semantics<arbitrary>], iteration_bounds = array<i64: 1, 1>, scalar_prefetch = 0 : i64, scratch_operands = 0 : i64, tpu.core_type = #tpu.core_type<tc>, window_params = [{transform_indices = @transform_0, window_bounds = array<i64: 512, 32>}, {pipeline_mode = #tpu.pipeline_mode<synchronous>, transform_indices = @transform_1, window_bounds = array<i64: 128, 32>}, {pipeline_mode = #tpu.pipeline_mode<synchronous>, transform_indices = @transform_2, window_bounds = array<i64: 1, 128>}, {transform_indices = @transform_3, window_bounds = array<i64: 512, 32>}, {transform_indices = @transform_4, window_bounds = array<i64: 512, 1>}, {transform_indices = @transform_5, window_bounds = array<i64: 1, 1, 128>}, {transform_indices = @transform_6, window_bounds = array<i64: 1, 1, 32>}]} {
    %c0 = arith.constant 0 : index
    %c0_0 = arith.constant 0 : index
    %0 = vector.load %arg2[%c0, %c0_0] : memref<512x32xf32, #tpu.memory_space<vmem>>, vector<512x32xf32>
    %c0_1 = arith.constant 0 : index
    %c0_2 = arith.constant 0 : index
    %1 = vector.load %arg3[%c0_1, %c0_2] : memref<128x32xf32, #tpu.memory_space<vmem>>, vector<128x32xf32>
    %c0_3 = arith.constant 0 : index
    %c0_4 = arith.constant 0 : index
    %2 = vector.load %arg4[%c0_3, %c0_4] : memref<1x128xf32, #tpu.memory_space<vmem>>, vector<1x128xf32>
    %3 = tpu.transpose %1, [1, 0] : vector<128x32xf32> -> vector<32x128xf32>
    %cst = arith.constant dense<0.000000e+00> : vector<512x128xf32>
    %4 = tpu.matmul %0, %3, %cst {dimension_numbers = #tpu.dot_dimension_numbers<[1], [0], [0], [1], [0, 0, 1, 1], [], []>} : vector<512x32xf32>, vector<32x128xf32>, vector<512x128xf32> -> vector<512x128xf32>
    %cst_5 = arith.constant 2.000000e+00 : f32
    %5 = vector.broadcast %cst_5 : f32 to vector<512x128xf32>
    %6 = arith.mulf %5, %4 : vector<512x128xf32>
    %7 = vector.broadcast %2 : vector<1x128xf32> to vector<512x128xf32>
    %8 = arith.subf %7, %6 : vector<512x128xf32>
    %9 = tpu.reduce_index %8 {axis = 1 : i32, kind = #tpu.reduction_kind<arg_min>} : vector<512x128xf32> -> vector<512xi32>
    %10 = vector.shape_cast %9 : vector<512xi32> to vector<512x1xi32>
    %11 = tpu.iota {dimensions = array<i32: 1>} : vector<512x128xi32>
    %12 = vector.broadcast %10 : vector<512x1xi32> to vector<512x128xi32>
    %13 = arith.cmpi eq, %12, %11 : vector<512x128xi32>
    %14 = arith.extui %13 : vector<512x128xi1> to vector<512x128xi32>
    %15 = arith.sitofp %14 : vector<512x128xi32> to vector<512x128xf32>
    %cst_6 = arith.constant dense<0.000000e+00> : vector<512x32xf32>
    %16 = tpu.matmul %15, %1, %cst_6 {dimension_numbers = #tpu.dot_dimension_numbers<[1], [0], [0], [1], [0, 0, 1, 1], [], []>} : vector<512x128xf32>, vector<128x32xf32>, vector<512x32xf32> -> vector<512x32xf32>
    %c0_7 = arith.constant 0 : index
    %c0_8 = arith.constant 0 : index
    %17 = vector.load %arg5[%c0_7, %c0_8] : memref<512x32xf32, #tpu.memory_space<vmem>>, vector<512x32xf32>
    tpu.vector_store %arg5[%c0_7, %c0_8], %16 {strides = array<i32>} : memref<512x32xf32, #tpu.memory_space<vmem>>, vector<512x32xf32>,
    %18 = vector.shape_cast %9 : vector<512xi32> to vector<512x1xi32>
    %c0_9 = arith.constant 0 : index
    %c0_10 = arith.constant 0 : index
    %19 = vector.load %arg6[%c0_9, %c0_10] : memref<512x1xi32, #tpu.memory_space<vmem>>, vector<512x1xi32>
    tpu.vector_store %arg6[%c0_9, %c0_10], %18 {strides = array<i32>} : memref<512x1xi32, #tpu.memory_space<vmem>>, vector<512x1xi32>,
    %c0_i32 = arith.constant 0 : i32
    %20 = arith.cmpi eq, %arg1, %c0_i32 : i32
    %21 = arith.extui %20 : i1 to i32
    %c0_i32_11 = arith.constant 0 : i32
    %22 = arith.cmpi ne, %21, %c0_i32_11 : i32
    scf.if %22 {
      %cst_26 = arith.constant 0.000000e+00 : f32
      %35 = vector.broadcast %cst_26 : f32 to vector<1x1x128xf32>
      %c0_27 = arith.constant 0 : index
      %c0_28 = arith.constant 0 : index
      %c0_29 = arith.constant 0 : index
      %36 = vector.load %arg7[%c0_27, %c0_28, %c0_29] : memref<1x1x128xf32, #tpu.memory_space<vmem>>, vector<1x1x128xf32>
      tpu.vector_store %arg7[%c0_27, %c0_28, %c0_29], %35 {strides = array<i32>} : memref<1x1x128xf32, #tpu.memory_space<vmem>>, vector<1x1x128xf32>,
      %cst_30 = arith.constant 0.000000e+00 : f32
      %37 = vector.broadcast %cst_30 : f32 to vector<1x1x32xf32>
      %c0_31 = arith.constant 0 : index
      %c0_32 = arith.constant 0 : index
      %c0_33 = arith.constant 0 : index
      %38 = vector.load %arg8[%c0_31, %c0_32, %c0_33] : memref<1x1x32xf32, #tpu.memory_space<vmem>>, vector<1x1x32xf32>
      tpu.vector_store %arg8[%c0_31, %c0_32, %c0_33], %37 {strides = array<i32>} : memref<1x1x32xf32, #tpu.memory_space<vmem>>, vector<1x1x32xf32>,
    } else {
    }
    %23 = arith.subf %16, %0 : vector<512x32xf32>
    %c0_12 = arith.constant 0 : index
    %c0_13 = arith.constant 0 : index
    %c0_14 = arith.constant 0 : index
    %24 = vector.load %arg7[%c0_12, %c0_13, %c0_14] : memref<1x1x128xf32, #tpu.memory_space<vmem>>, vector<1x1x128xf32>
    %cst_15 = arith.constant dense<0.000000e+00> : vector<128xf32>
    %25 = vector.multi_reduction <add>, %15, %cst_15 [0] : vector<512x128xf32> to vector<128xf32>
    %26 = vector.shape_cast %25 : vector<128xf32> to vector<1x1x128xf32>
    %27 = arith.addf %24, %26 : vector<1x1x128xf32>
    %c0_16 = arith.constant 0 : index
    %c0_17 = arith.constant 0 : index
    %c0_18 = arith.constant 0 : index
    %28 = vector.load %arg7[%c0_16, %c0_17, %c0_18] : memref<1x1x128xf32, #tpu.memory_space<vmem>>, vector<1x1x128xf32>
    tpu.vector_store %arg7[%c0_16, %c0_17, %c0_18], %27 {strides = array<i32>} : memref<1x1x128xf32, #tpu.memory_space<vmem>>, vector<1x1x128xf32>,
    %c0_19 = arith.constant 0 : index
    %c0_20 = arith.constant 0 : index
    %c0_21 = arith.constant 0 : index
    %29 = vector.load %arg8[%c0_19, %c0_20, %c0_21] : memref<1x1x32xf32, #tpu.memory_space<vmem>>, vector<1x1x32xf32>
    %30 = arith.mulf %23, %23 : vector<512x32xf32>
    %cst_22 = arith.constant dense<0.000000e+00> : vector<32xf32>
    %31 = vector.multi_reduction <add>, %30, %cst_22 [0] : vector<512x32xf32> to vector<32xf32>
    %32 = vector.shape_cast %31 : vector<32xf32> to vector<1x1x32xf32>
    %33 = arith.addf %29, %32 : vector<1x1x32xf32>
    %c0_23 = arith.constant 0 : index
    %c0_24 = arith.constant 0 : index
    %c0_25 = arith.constant 0 : index
    %34 = vector.load %arg8[%c0_23, %c0_24, %c0_25] : memref<1x1x32xf32, #tpu.memory_space<vmem>>, vector<1x1x32xf32>
    tpu.vector_store %arg8[%c0_23, %c0_24, %c0_25], %33 {strides = array<i32>} : memref<1x1x32xf32, #tpu.memory_space<vmem>>, vector<1x1x32xf32>,
    return
  }
  func.func @transform_0(%arg0: i32, %arg1: i32) -> (i32, i32) {
    %c1_i32 = arith.constant 1 : i32
    %0 = arith.muli %arg0, %c1_i32 : i32
    %1 = arith.addi %0, %arg1 : i32
    %c0_i32 = arith.constant 0 : i32
    %c0_i32_0 = arith.constant 0 : i32
    return %1, %c0_i32 : i32, i32
  }
  func.func @transform_1(%arg0: i32, %arg1: i32) -> (i32, i32) {
    %c0_i32 = arith.constant 0 : i32
    %c0_i32_0 = arith.constant 0 : i32
    %c0_i32_1 = arith.constant 0 : i32
    return %c0_i32, %c0_i32_0 : i32, i32
  }
  func.func @transform_2(%arg0: i32, %arg1: i32) -> (i32, i32) {
    %c0_i32 = arith.constant 0 : i32
    %c0_i32_0 = arith.constant 0 : i32
    %c0_i32_1 = arith.constant 0 : i32
    return %c0_i32, %c0_i32_0 : i32, i32
  }
  func.func @transform_3(%arg0: i32, %arg1: i32) -> (i32, i32) {
    %c1_i32 = arith.constant 1 : i32
    %0 = arith.muli %arg0, %c1_i32 : i32
    %1 = arith.addi %0, %arg1 : i32
    %c0_i32 = arith.constant 0 : i32
    %c0_i32_0 = arith.constant 0 : i32
    return %1, %c0_i32 : i32, i32
  }
  func.func @transform_4(%arg0: i32, %arg1: i32) -> (i32, i32) {
    %c1_i32 = arith.constant 1 : i32
    %0 = arith.muli %arg0, %c1_i32 : i32
    %1 = arith.addi %0, %arg1 : i32
    %c0_i32 = arith.constant 0 : i32
    %c0_i32_0 = arith.constant 0 : i32
    return %1, %c0_i32 : i32, i32
  }
  func.func @transform_5(%arg0: i32, %arg1: i32) -> (i32, i32, i32) {
    %c0_i32 = arith.constant 0 : i32
    %c0_i32_0 = arith.constant 0 : i32
    %c0_i32_1 = arith.constant 0 : i32
    return %arg0, %c0_i32, %c0_i32_0 : i32, i32, i32
  }
  func.func @transform_6(%arg0: i32, %arg1: i32) -> (i32, i32, i32) {
    %c0_i32 = arith.constant 0 : i32
    %c0_i32_0 = arith.constant 0 : i32
    %c0_i32_1 = arith.constant 0 : i32
    return %arg0, %c0_i32, %c0_i32_0 : i32, i32, i32
  }
}

</mosaic_0001>

<llo_original>
// kernel: tpu_custom_call.1
$region0: #{tpu_custom_call.1}
  #allocation0 [shape = 'u32[]', space=smem, size = 0x4, offset = 0x4, fixed_abs, tag = 'smem constant byte address 0x4 - core index']
  #allocation1 [shape = 'u32[72,128]{1,0:T(1,128)}', space=vmem, size = 0x9000, scoped, tag = 'internal scratch']
  %s0 = inlined_call_operand.vmem [shape: f32[512,32], index: 0, kind: input, shape index: {}]
  %s1 = inlined_call_operand.vmem [shape: f32[128,32], index: 1, kind: input, shape index: {}]
  %s2 = inlined_call_operand.vmem [shape: f32[1,128], index: 2, kind: input, shape index: {}]
  %s3 = inlined_call_operand.vmem [shape: f32[512,32], index: 3, kind: output, shape index: {0}]
  %s4 = inlined_call_operand.vmem [shape: s32[512,1], index: 4, kind: output, shape index: {1}]
  %s5 = inlined_call_operand.hbm [shape: f32[1,1,128], index: 5, kind: output, shape index: {2}]
  %s6 = inlined_call_operand.hbm [shape: f32[1,1,32], index: 6, kind: output, shape index: {3}]
  %7 = xla_tuple %s3, %s4, %s5, %s6
  %s8 = sld [smem:[#allocation0]]
  $region50: #{tpu_custom_call.1} parent=0
    _
  %s10 = ssub.s32 1, %s8
  %s11 = scalar_select 0, %s10, %s8
  $region1: #{tpu_custom_call.1} parent=0
    #allocation2 [shape = 'u8[512]{0}', space=vmem, size = 0x400, scoped, tag = 'output window, operand 2, single buffered']
    #allocation3 [shape = 's32[1]{0}', space=sflag, size = 0x4, scoped, tag = 'scoped memory for tpu_custom_call.1']
    #allocation4 [shape = 'u8[512]{0}', space=vmem, size = 0x400, scoped, tag = 'output window, operand 3, single buffered']
    #allocation5 [shape = 's32[1]{0}', space=sflag, size = 0x4, scoped, tag = 'scoped memory for tpu_custom_call.1']
    %12 = vsyncpa [#allocation3], 0
    %13 = vsyncpa [#allocation5], 0
    // Predicated region
    $region2: #{tpu_custom_call.1} parent=1 // pred_check
      _
    $region3: #{tpu_custom_call.1} parent=1 // pred_check_branch
      %15 = sbr.rel (0) target = $region5
    $region4: #{tpu_custom_call.1} parent=1 // pred_region
      %s16 = sadd.s32 0, 0
      %s17 = smul.u32 64, %s16
      %p18 = scmp.lt.s32.totalorder %s17, 63
      %s19 = scalar_select %p18, %s17, 63
      %s20 = smul.addr %s19, 8
      %s21 = scalar_lea.vmem %s0, %s20
      %s22 = sadd.s32 0, 0
      %s23 = smul.u32 64, %s22
    $region5: #{tpu_custom_call.1} parent=1 // pred_fallthru
      _
    // Predicated region
    $region6: #{tpu_custom_call.1} parent=1 // pred_check
      _
    $region7: #{tpu_custom_call.1} parent=1 // pred_check_branch
      %25 = sbr.rel (0) target = $region9
    $region8: #{tpu_custom_call.1} parent=1 // pred_region
      _
    $region9: #{tpu_custom_call.1} parent=1 // pred_fallthru
      _
    // Predicated region
    $region10: #{tpu_custom_call.1} parent=1 // pred_check
      _
    $region11: #{tpu_custom_call.1} parent=1 // pred_check_branch
      %27 = sbr.rel (0) target = $region13
    $region12: #{tpu_custom_call.1} parent=1 // pred_region
      _
    $region13: #{tpu_custom_call.1} parent=1 // pred_fallthru
      _
    %s28 = sadd.s32 0, 0
    %s29 = smul.u32 64, %s28
    %p30 = scmp.lt.s32.totalorder %s29, 63
    %s31 = scalar_select %p30, %s29, 63
    %s32 = smul.addr %s31, 8
    %s33 = scalar_lea.vmem %s0, %s32
    %s34 = sadd.s32 0, 0
    %s35 = smul.u32 64, %s34
    %p36 = scmp.lt.s32.totalorder %s35, 63
    %s37 = scalar_select %p36, %s35, 63
    %s38 = smul.addr %s37, 8
    %s39 = scalar_lea.vmem %s3, %s38
    %s40 = sadd.s32 0, 0
    %s41 = smul.u32 64, %s40
    %p42 = scmp.lt.s32.totalorder %s41, 63
    %s43 = scalar_select %p42, %s41, 63
    %s44 = smul.addr %s43, 8
    %s45 = scalar_lea.vmem %s4, %s44
    %s46 = sadd.s32 0, 0
    %s47 = smul.u32 64, %s46
    %p48 = scmp.lt.s32.totalorder %s47, 63
    %s49 = scalar_select %p48, %s47, 63
    %s50 = smul.addr %s49, 8
    %s51 = scalar_lea.vmem %s0, %s50
    %s52 = sadd.s32 0, 0
    %s53 = smul.u32 64, %s52
    %s54 = sadd.s32 0, 0
    %s55 = smul.u32 64, %s54
    %p56 = scmp.lt.s32.totalorder %s55, 63
    %s57 = scalar_select %p56, %s55, 63
    %s58 = smul.addr %s57, 8
    %s59 = scalar_lea.vmem %s3, %s58
    %s60 = sadd.s32 0, 0
    %s61 = smul.u32 64, %s60
    %s62 = sadd.s32 0, 0
    %s63 = smul.u32 64, %s62
    %p64 = scmp.lt.s32.totalorder %s63, 63
    %s65 = scalar_select %p64, %s63, 63
    %s66 = smul.addr %s65, 8
    %s67 = scalar_lea.vmem %s4, %s66
    %s68 = sadd.s32 0, 0
    %s69 = smul.u32 64, %s68
    %v70 = vld [vmem:[%s51] sm:$0xff]
    %v71 = vld [vmem:[%s51 + $0x8] sm:$0xff]
    %v72 = vld [vmem:[%s51 + $0x10] sm:$0xff]
    %v73 = vld [vmem:[%s51 + $0x18] sm:$0xff]
    %v74 = vld [vmem:[%s51 + $0x20] sm:$0xff]
    %v75 = vld [vmem:[%s51 + $0x28] sm:$0xff]
    %v76 = vld [vmem:[%s51 + $0x30] sm:$0xff]
    %v77 = vld [vmem:[%s51 + $0x38] sm:$0xff]
    %v78 = vld [vmem:[%s51 + $0x40] sm:$0xff]
    %v79 = vld [vmem:[%s51 + $0x48] sm:$0xff]
    %v80 = vld [vmem:[%s51 + $0x50] sm:$0xff]
    %v81 = vld [vmem:[%s51 + $0x58] sm:$0xff]
    %v82 = vld [vmem:[%s51 + $0x60] sm:$0xff]
    %v83 = vld [vmem:[%s51 + $0x68] sm:$0xff]
    %v84 = vld [vmem:[%s51 + $0x70] sm:$0xff]
    %v85 = vld [vmem:[%s51 + $0x78] sm:$0xff]
    %v86 = vld [vmem:[%s51 + $0x80] sm:$0xff]
    %v87 = vld [vmem:[%s51 + $0x88] sm:$0xff]
    %v88 = vld [vmem:[%s51 + $0x90] sm:$0xff]
    %v89 = vld [vmem:[%s51 + $0x98] sm:$0xff]
    %v90 = vld [vmem:[%s51 + $0xa0] sm:$0xff]
    %v91 = vld [vmem:[%s51 + $0xa8] sm:$0xff]
    %v92 = vld [vmem:[%s51 + $0xb0] sm:$0xff]
    %v93 = vld [vmem:[%s51 + $0xb8] sm:$0xff]
    %v94 = vld [vmem:[%s51 + $0xc0] sm:$0xff]
    %v95 = vld [vmem:[%s51 + $0xc8] sm:$0xff]
    %v96 = vld [vmem:[%s51 + $0xd0] sm:$0xff]
    %v97 = vld [vmem:[%s51 + $0xd8] sm:$0xff]
    %v98 = vld [vmem:[%s51 + $0xe0] sm:$0xff]
    %v99 = vld [vmem:[%s51 + $0xe8] sm:$0xff]
    %v100 = vld [vmem:[%s51 + $0xf0] sm:$0xff]
    %v101 = vld [vmem:[%s51 + $0xf8] sm:$0xff]
    %v102 = vld [vmem:[%s51 + $0x100] sm:$0xff]
    %v103 = vld [vmem:[%s51 + $0x108] sm:$0xff]
    %v104 = vld [vmem:[%s51 + $0x110] sm:$0xff]
    %v105 = vld [vmem:[%s51 + $0x118] sm:$0xff]
    %v106 = vld [vmem:[%s51 + $0x120] sm:$0xff]
    %v107 = vld [vmem:[%s51 + $0x128] sm:$0xff]
    %v108 = vld [vmem:[%s51 + $0x130] sm:$0xff]
    %v109 = vld [vmem:[%s51 + $0x138] sm:$0xff]
    %v110 = vld [vmem:[%s51 + $0x140] sm:$0xff]
    %v111 = vld [vmem:[%s51 + $0x148] sm:$0xff]
    %v112 = vld [vmem:[%s51 + $0x150] sm:$0xff]
    %v113 = vld [vmem:[%s51 + $0x158] sm:$0xff]
    %v114 = vld [vmem:[%s51 + $0x160] sm:$0xff]
    %v115 = vld [vmem:[%s51 + $0x168] sm:$0xff]
    %v116 = vld [vmem:[%s51 + $0x170] sm:$0xff]
    %v117 = vld [vmem:[%s51 + $0x178] sm:$0xff]
    %v118 = vld [vmem:[%s51 + $0x180] sm:$0xff]
    %v119 = vld [vmem:[%s51 + $0x188] sm:$0xff]
    %v120 = vld [vmem:[%s51 + $0x190] sm:$0xff]
    %v121 = vld [vmem:[%s51 + $0x198] sm:$0xff]
    %v122 = vld [vmem:[%s51 + $0x1a0] sm:$0xff]
    %v123 = vld [vmem:[%s51 + $0x1a8] sm:$0xff]
    %v124 = vld [vmem:[%s51 + $0x1b0] sm:$0xff]
    %v125 = vld [vmem:[%s51 + $0x1b8] sm:$0xff]
    %v126 = vld [vmem:[%s51 + $0x1c0] sm:$0xff]
    %v127 = vld [vmem:[%s51 + $0x1c8] sm:$0xff]
    %v128 = vld [vmem:[%s51 + $0x1d0] sm:$0xff]
    %v129 = vld [vmem:[%s51 + $0x1d8] sm:$0xff]
    %v130 = vld [vmem:[%s51 + $0x1e0] sm:$0xff]
    %v131 = vld [vmem:[%s51 + $0x1e8] sm:$0xff]
    %v132 = vld [vmem:[%s51 + $0x1f0] sm:$0xff]
    %v133 = vld [vmem:[%s51 + $0x1f8] sm:$0xff]
    %v134 = vld [vmem:[%s1] sm:$0xff]
    %v135 = vld [vmem:[%s1 + $0x8] sm:$0xff]
    %v136 = vld [vmem:[%s1 + $0x10] sm:$0xff]
    %v137 = vld [vmem:[%s1 + $0x18] sm:$0xff]
    %v138 = vld [vmem:[%s1 + $0x20] sm:$0xff]
    %v139 = vld [vmem:[%s1 + $0x28] sm:$0xff]
    %v140 = vld [vmem:[%s1 + $0x30] sm:$0xff]
    %v141 = vld [vmem:[%s1 + $0x38] sm:$0xff]
    %v142 = vld [vmem:[%s1 + $0x40] sm:$0xff]
    %v143 = vld [vmem:[%s1 + $0x48] sm:$0xff]
    %v144 = vld [vmem:[%s1 + $0x50] sm:$0xff]
    %v145 = vld [vmem:[%s1 + $0x58] sm:$0xff]
    %v146 = vld [vmem:[%s1 + $0x60] sm:$0xff]
    %v147 = vld [vmem:[%s1 + $0x68] sm:$0xff]
    %v148 = vld [vmem:[%s1 + $0x70] sm:$0xff]
    %v149 = vld [vmem:[%s1 + $0x78] sm:$0xff]
    %v150 = vld [vmem:[%s2] sm:$0x1]
    %vm151 = vcmask 261120
    %v153 = vsel %vm151, %v70, 0
    %v156 = vsel %vm151, %v71, 0
    %v159 = vsel %vm151, %v72, 0
    %v162 = vsel %vm151, %v73, 0
    %v165 = vsel %vm151, %v74, 0
    %v168 = vsel %vm151, %v75, 0
    %v171 = vsel %vm151, %v76, 0
    %v174 = vsel %vm151, %v77, 0
    %v177 = vsel %vm151, %v78, 0
    %v180 = vsel %vm151, %v79, 0
    %v183 = vsel %vm151, %v80, 0
    %v186 = vsel %vm151, %v81, 0
    %v189 = vsel %vm151, %v82, 0
    %v192 = vsel %vm151, %v83, 0
    %v195 = vsel %vm151, %v84, 0
    %v198 = vsel %vm151, %v85, 0
    %v201 = vsel %vm151, %v86, 0
    %v204 = vsel %vm151, %v87, 0
    %v207 = vsel %vm151, %v88, 0
    %v210 = vsel %vm151, %v89, 0
    %v213 = vsel %vm151, %v90, 0
    %v216 = vsel %vm151, %v91, 0
    %v219 = vsel %vm151, %v92, 0
    %v222 = vsel %vm151, %v93, 0
    %v225 = vsel %vm151, %v94, 0
    %v228 = vsel %vm151, %v95, 0
    %v231 = vsel %vm151, %v96, 0
    %v234 = vsel %vm151, %v97, 0
    %v237 = vsel %vm151, %v98, 0
    %v240 = vsel %vm151, %v99, 0
    %v243 = vsel %vm151, %v100, 0
    %v246 = vsel %vm151, %v101, 0
    %v249 = vsel %vm151, %v102, 0
    %v252 = vsel %vm151, %v103, 0
    %v255 = vsel %vm151, %v104, 0
    %v258 = vsel %vm151, %v105, 0
    %v261 = vsel %vm151, %v106, 0
    %v264 = vsel %vm151, %v107, 0
    %v267 = vsel %vm151, %v108, 0
    %v270 = vsel %vm151, %v109, 0
    %v273 = vsel %vm151, %v110, 0
    %v276 = vsel %vm151, %v111, 0
    %v279 = vsel %vm151, %v112, 0
    %v282 = vsel %vm151, %v113, 0
    %v285 = vsel %vm151, %v114, 0
    %v288 = vsel %vm151, %v115, 0
    %v291 = vsel %vm151, %v116, 0
    %v294 = vsel %vm151, %v117, 0
    %v297 = vsel %vm151, %v118, 0
    %v300 = vsel %vm151, %v119, 0
    %v303 = vsel %vm151, %v120, 0
    %v306 = vsel %vm151, %v121, 0
    %v309 = vsel %vm151, %v122, 0
    %v312 = vsel %vm151, %v123, 0
    %v315 = vsel %vm151, %v124, 0
    %v318 = vsel %vm151, %v125, 0
    %v321 = vsel %vm151, %v126, 0
    %v324 = vsel %vm151, %v127, 0
    %v327 = vsel %vm151, %v128, 0
    %v330 = vsel %vm151, %v129, 0
    %v333 = vsel %vm151, %v130, 0
    %v336 = vsel %vm151, %v131, 0
    %v339 = vsel %vm151, %v132, 0
    %v342 = vsel %vm151, %v133, 0
    %v345 = vsel %vm151, %v134, 0
    %v348 = vsel %vm151, %v135, 0
    %v351 = vsel %vm151, %v136, 0
    %v354 = vsel %vm151, %v137, 0
    %v357 = vsel %vm151, %v138, 0
    %v360 = vsel %vm151, %v139, 0
    %v363 = vsel %vm151, %v140, 0
    %v366 = vsel %vm151, %v141, 0
    %v369 = vsel %vm151, %v142, 0
    %v372 = vsel %vm151, %v143, 0
    %v375 = vsel %vm151, %v144, 0
    %v378 = vsel %vm151, %v145, 0
    %v381 = vsel %vm151, %v146, 0
    %v384 = vsel %vm151, %v147, 0
    %v387 = vsel %vm151, %v148, 0
    %v390 = vsel %vm151, %v149, 0
    %392 = vmatpush.xpose.msra.mxu0 %v390
    %393 = vmatpush.xpose.msra.mxu0 %v387
    %394 = vmatpush.xpose.msra.mxu0 %v384
    %395 = vmatpush.xpose.msra.mxu0 %v381
    %396 = vmatpush.xpose.msra.mxu0 %v378
    %397 = vmatpush.xpose.msra.mxu0 %v375
    %398 = vmatpush.xpose.msra.mxu0 %v372
    %399 = vmatpush.xpose.msra.mxu0 %v369
    %400 = vmatpush.xpose.msra.mxu0 %v366
    %401 = vmatpush.xpose.msra.mxu0 %v363
    %402 = vmatpush.xpose.msra.mxu0 %v360
    %403 = vmatpush.xpose.msra.mxu0 %v357
    %404 = vmatpush.xpose.msra.mxu0 %v354
    %405 = vmatpush.xpose.msra.mxu0 %v351
    %406 = vmatpush.xpose.msra.mxu0 %v348
    %407 = vmatpush.xpose.msra.mxu0 %v345
    %408 = vmatmul.f32.gmra.mxu0 %v153
    %v409 = vpop.f32.mrf.mxu0
    %v410 = vadd.f32 0.0, %v409
    %411 = vmatmul.f32.gmra.mxu0 %v156
    %v412 = vpop.f32.mrf.mxu0
    %v413 = vadd.f32 0.0, %v412
    %414 = vmatmul.f32.gmra.mxu0 %v159
    %v415 = vpop.f32.mrf.mxu0
    %v416 = vadd.f32 0.0, %v415
    %417 = vmatmul.f32.gmra.mxu0 %v162
    %v418 = vpop.f32.mrf.mxu0
    %v419 = vadd.f32 0.0, %v418
    %420 = vmatmul.f32.gmra.mxu0 %v165
    %v421 = vpop.f32.mrf.mxu0
    %v422 = vadd.f32 0.0, %v421
    %423 = vmatmul.f32.gmra.mxu0 %v168
    %v424 = vpop.f32.mrf.mxu0
    %v425 = vadd.f32 0.0, %v424
    %426 = vmatmul.f32.gmra.mxu0 %v171
    %v427 = vpop.f32.mrf.mxu0
    %v428 = vadd.f32 0.0, %v427
    %429 = vmatmul.f32.gmra.mxu0 %v174
    %v430 = vpop.f32.mrf.mxu0
    %v431 = vadd.f32 0.0, %v430
    %432 = vmatmul.f32.gmra.mxu0 %v177
    %v433 = vpop.f32.mrf.mxu0
    %v434 = vadd.f32 0.0, %v433
    %435 = vmatmul.f32.gmra.mxu0 %v180
    %v436 = vpop.f32.mrf.mxu0
    %v437 = vadd.f32 0.0, %v436
    %438 = vmatmul.f32.gmra.mxu0 %v183
    %v439 = vpop.f32.mrf.mxu0
    %v440 = vadd.f32 0.0, %v439
    %441 = vmatmul.f32.gmra.mxu0 %v186
    %v442 = vpop.f32.mrf.mxu0
    %v443 = vadd.f32 0.0, %v442
    %444 = vmatmul.f32.gmra.mxu0 %v189
    %v445 = vpop.f32.mrf.mxu0
    %v446 = vadd.f32 0.0, %v445
    %447 = vmatmul.f32.gmra.mxu0 %v192
    %v448 = vpop.f32.mrf.mxu0
    %v449 = vadd.f32 0.0, %v448
    %450 = vmatmul.f32.gmra.mxu0 %v195
    %v451 = vpop.f32.mrf.mxu0
    %v452 = vadd.f32 0.0, %v451
    %453 = vmatmul.f32.gmra.mxu0 %v198
    %v454 = vpop.f32.mrf.mxu0
    %v455 = vadd.f32 0.0, %v454
    %456 = vmatmul.f32.gmra.mxu0 %v201
    %v457 = vpop.f32.mrf.mxu0
    %v458 = vadd.f32 0.0, %v457
    %459 = vmatmul.f32.gmra.mxu0 %v204
    %v460 = vpop.f32.mrf.mxu0
    %v461 = vadd.f32 0.0, %v460
    %462 = vmatmul.f32.gmra.mxu0 %v207
    %v463 = vpop.f32.mrf.mxu0
    %v464 = vadd.f32 0.0, %v463
    %465 = vmatmul.f32.gmra.mxu0 %v210
    %v466 = vpop.f32.mrf.mxu0
    %v467 = vadd.f32 0.0, %v466
    %468 = vmatmul.f32.gmra.mxu0 %v213
    %v469 = vpop.f32.mrf.mxu0
    %v470 = vadd.f32 0.0, %v469
    %471 = vmatmul.f32.gmra.mxu0 %v216
    %v472 = vpop.f32.mrf.mxu0
    %v473 = vadd.f32 0.0, %v472
    %474 = vmatmul.f32.gmra.mxu0 %v219
    %v475 = vpop.f32.mrf.mxu0
    %v476 = vadd.f32 0.0, %v475
    %477 = vmatmul.f32.gmra.mxu0 %v222
    %v478 = vpop.f32.mrf.mxu0
    %v479 = vadd.f32 0.0, %v478
    %480 = vmatmul.f32.gmra.mxu0 %v225
    %v481 = vpop.f32.mrf.mxu0
    %v482 = vadd.f32 0.0, %v481
    %483 = vmatmul.f32.gmra.mxu0 %v228
    %v484 = vpop.f32.mrf.mxu0
    %v485 = vadd.f32 0.0, %v484
    %486 = vmatmul.f32.gmra.mxu0 %v231
    %v487 = vpop.f32.mrf.mxu0
    %v488 = vadd.f32 0.0, %v487
    %489 = vmatmul.f32.gmra.mxu0 %v234
    %v490 = vpop.f32.mrf.mxu0
    %v491 = vadd.f32 0.0, %v490
    %492 = vmatmul.f32.gmra.mxu0 %v237
    %v493 = vpop.f32.mrf.mxu0
    %v494 = vadd.f32 0.0, %v493
    %495 = vmatmul.f32.gmra.mxu0 %v240
    %v496 = vpop.f32.mrf.mxu0
    %v497 = vadd.f32 0.0, %v496
    %498 = vmatmul.f32.gmra.mxu0 %v243
    %v499 = vpop.f32.mrf.mxu0
    %v500 = vadd.f32 0.0, %v499
    %501 = vmatmul.f32.gmra.mxu0 %v246
    %v502 = vpop.f32.mrf.mxu0
    %v503 = vadd.f32 0.0, %v502
    %504 = vmatmul.f32.gmra.mxu0 %v249
    %v505 = vpop.f32.mrf.mxu0
    %v506 = vadd.f32 0.0, %v505
    %507 = vmatmul.f32.gmra.mxu0 %v252
    %v508 = vpop.f32.mrf.mxu0
    %v509 = vadd.f32 0.0, %v508
    %510 = vmatmul.f32.gmra.mxu0 %v255
    %v511 = vpop.f32.mrf.mxu0
    %v512 = vadd.f32 0.0, %v511
    %513 = vmatmul.f32.gmra.mxu0 %v258
    %v514 = vpop.f32.mrf.mxu0
    %v515 = vadd.f32 0.0, %v514
    %516 = vmatmul.f32.gmra.mxu0 %v261
    %v517 = vpop.f32.mrf.mxu0
    %v518 = vadd.f32 0.0, %v517
    %519 = vmatmul.f32.gmra.mxu0 %v264
    %v520 = vpop.f32.mrf.mxu0
    %v521 = vadd.f32 0.0, %v520
    %522 = vmatmul.f32.gmra.mxu0 %v267
    %v523 = vpop.f32.mrf.mxu0
    %v524 = vadd.f32 0.0, %v523
    %525 = vmatmul.f32.gmra.mxu0 %v270
    %v526 = vpop.f32.mrf.mxu0
    %v527 = vadd.f32 0.0, %v526
    %528 = vmatmul.f32.gmra.mxu0 %v273
    %v529 = vpop.f32.mrf.mxu0
    %v530 = vadd.f32 0.0, %v529
    %531 = vmatmul.f32.gmra.mxu0 %v276
    %v532 = vpop.f32.mrf.mxu0
    %v533 = vadd.f32 0.0, %v532
    %534 = vmatmul.f32.gmra.mxu0 %v279
    %v535 = vpop.f32.mrf.mxu0
    %v536 = vadd.f32 0.0, %v535
    %537 = vmatmul.f32.gmra.mxu0 %v282
    %v538 = vpop.f32.mrf.mxu0
    %v539 = vadd.f32 0.0, %v538
    %540 = vmatmul.f32.gmra.mxu0 %v285
    %v541 = vpop.f32.mrf.mxu0
    %v542 = vadd.f32 0.0, %v541
    %543 = vmatmul.f32.gmra.mxu0 %v288
    %v544 = vpop.f32.mrf.mxu0
    %v545 = vadd.f32 0.0, %v544
    %546 = vmatmul.f32.gmra.mxu0 %v291
    %v547 = vpop.f32.mrf.mxu0
    %v548 = vadd.f32 0.0, %v547
    %549 = vmatmul.f32.gmra.mxu0 %v294
    %v550 = vpop.f32.mrf.mxu0
    %v551 = vadd.f32 0.0, %v550
    %552 = vmatmul.f32.gmra.mxu0 %v297
    %v553 = vpop.f32.mrf.mxu0
    %v554 = vadd.f32 0.0, %v553
    %555 = vmatmul.f32.gmra.mxu0 %v300
    %v556 = vpop.f32.mrf.mxu0
    %v557 = vadd.f32 0.0, %v556
    %558 = vmatmul.f32.gmra.mxu0 %v303
    %v559 = vpop.f32.mrf.mxu0
    %v560 = vadd.f32 0.0, %v559
    %561 = vmatmul.f32.gmra.mxu0 %v306
    %v562 = vpop.f32.mrf.mxu0
    %v563 = vadd.f32 0.0, %v562
    %564 = vmatmul.f32.gmra.mxu0 %v309
    %v565 = vpop.f32.mrf.mxu0
    %v566 = vadd.f32 0.0, %v565
    %567 = vmatmul.f32.gmra.mxu0 %v312
    %v568 = vpop.f32.mrf.mxu0
    %v569 = vadd.f32 0.0, %v568
    %570 = vmatmul.f32.gmra.mxu0 %v315
    %v571 = vpop.f32.mrf.mxu0
    %v572 = vadd.f32 0.0, %v571
    %573 = vmatmul.f32.gmra.mxu0 %v318
    %v574 = vpop.f32.mrf.mxu0
    %v575 = vadd.f32 0.0, %v574
    %576 = vmatmul.f32.gmra.mxu0 %v321
    %v577 = vpop.f32.mrf.mxu0
    %v578 = vadd.f32 0.0, %v577
    %579 = vmatmul.f32.gmra.mxu0 %v324
    %v580 = vpop.f32.mrf.mxu0
    %v581 = vadd.f32 0.0, %v580
    %582 = vmatmul.f32.gmra.mxu0 %v327
    %v583 = vpop.f32.mrf.mxu0
    %v584 = vadd.f32 0.0, %v583
    %585 = vmatmul.f32.gmra.mxu0 %v330
    %v586 = vpop.f32.mrf.mxu0
    %v587 = vadd.f32 0.0, %v586
    %588 = vmatmul.f32.gmra.mxu0 %v333
    %v589 = vpop.f32.mrf.mxu0
    %v590 = vadd.f32 0.0, %v589
    %591 = vmatmul.f32.gmra.mxu0 %v336
    %v592 = vpop.f32.mrf.mxu0
    %v593 = vadd.f32 0.0, %v592
    %594 = vmatmul.f32.gmra.mxu0 %v339
    %v595 = vpop.f32.mrf.mxu0
    %v596 = vadd.f32 0.0, %v595
    %597 = vmatmul.f32.gmra.mxu0 %v342
    %v598 = vpop.f32.mrf.mxu0
    %v599 = vadd.f32 0.0, %v598
    %600 = vdwg.mxu0
    %v601 = vmul.f32 %v410, 2.0
    %v602 = vmul.f32 %v413, 2.0
    %v603 = vmul.f32 %v416, 2.0
    %v604 = vmul.f32 %v419, 2.0
    %v605 = vmul.f32 %v422, 2.0
    %v606 = vmul.f32 %v425, 2.0
    %v607 = vmul.f32 %v428, 2.0
    %v608 = vmul.f32 %v431, 2.0
    %v609 = vmul.f32 %v434, 2.0
    %v610 = vmul.f32 %v437, 2.0
    %v611 = vmul.f32 %v440, 2.0
    %v612 = vmul.f32 %v443, 2.0
    %v613 = vmul.f32 %v446, 2.0
    %v614 = vmul.f32 %v449, 2.0
    %v615 = vmul.f32 %v452, 2.0
    %v616 = vmul.f32 %v455, 2.0
    %v617 = vmul.f32 %v458, 2.0
    %v618 = vmul.f32 %v461, 2.0
    %v619 = vmul.f32 %v464, 2.0
    %v620 = vmul.f32 %v467, 2.0
    %v621 = vmul.f32 %v470, 2.0
    %v622 = vmul.f32 %v473, 2.0
    %v623 = vmul.f32 %v476, 2.0
    %v624 = vmul.f32 %v479, 2.0
    %v625 = vmul.f32 %v482, 2.0
    %v626 = vmul.f32 %v485, 2.0
    %v627 = vmul.f32 %v488, 2.0
    %v628 = vmul.f32 %v491, 2.0
    %v629 = vmul.f32 %v494, 2.0
    %v630 = vmul.f32 %v497, 2.0
    %v631 = vmul.f32 %v500, 2.0
    %v632 = vmul.f32 %v503, 2.0
    %v633 = vmul.f32 %v506, 2.0
    %v634 = vmul.f32 %v509, 2.0
    %v635 = vmul.f32 %v512, 2.0
    %v636 = vmul.f32 %v515, 2.0
    %v637 = vmul.f32 %v518, 2.0
    %v638 = vmul.f32 %v521, 2.0
    %v639 = vmul.f32 %v524, 2.0
    %v640 = vmul.f32 %v527, 2.0
    %v641 = vmul.f32 %v530, 2.0
    %v642 = vmul.f32 %v533, 2.0
    %v643 = vmul.f32 %v536, 2.0
    %v644 = vmul.f32 %v539, 2.0
    %v645 = vmul.f32 %v542, 2.0
    %v646 = vmul.f32 %v545, 2.0
    %v647 = vmul.f32 %v548, 2.0
    %v648 = vmul.f32 %v551, 2.0
    %v649 = vmul.f32 %v554, 2.0
    %v650 = vmul.f32 %v557, 2.0
    %v651 = vmul.f32 %v560, 2.0
    %v652 = vmul.f32 %v563, 2.0
    %v653 = vmul.f32 %v566, 2.0
    %v654 = vmul.f32 %v569, 2.0
    %v655 = vmul.f32 %v572, 2.0
    %v656 = vmul.f32 %v575, 2.0
    %v657 = vmul.f32 %v578, 2.0
    %v658 = vmul.f32 %v581, 2.0
    %v659 = vmul.f32 %v584, 2.0
    %v660 = vmul.f32 %v587, 2.0
    %v661 = vmul.f32 %v590, 2.0
    %v662 = vmul.f32 %v593, 2.0
    %v663 = vmul.f32 %v596, 2.0
    %v664 = vmul.f32 %v599, 2.0
    %v666 = vperm.slane %v150, 0
    %v668 = vsub.f32 %v666, %v601
    %v669 = vsub.f32 %v666, %v602
    %v670 = vsub.f32 %v666, %v603
    %v671 = vsub.f32 %v666, %v604
    %v672 = vsub.f32 %v666, %v605
    %v673 = vsub.f32 %v666, %v606
    %v674 = vsub.f32 %v666, %v607
    %v675 = vsub.f32 %v666, %v608
    %v676 = vsub.f32 %v666, %v609
    %v677 = vsub.f32 %v666, %v610
    %v678 = vsub.f32 %v666, %v611
    %v679 = vsub.f32 %v666, %v612
    %v680 = vsub.f32 %v666, %v613
    %v681 = vsub.f32 %v666, %v614
    %v682 = vsub.f32 %v666, %v615
    %v683 = vsub.f32 %v666, %v616
    %v684 = vsub.f32 %v666, %v617
    %v685 = vsub.f32 %v666, %v618
    %v686 = vsub.f32 %v666, %v619
    %v687 = vsub.f32 %v666, %v620
    %v688 = vsub.f32 %v666, %v621
    %v689 = vsub.f32 %v666, %v622
    %v690 = vsub.f32 %v666, %v623
    %v691 = vsub.f32 %v666, %v624
    %v692 = vsub.f32 %v666, %v625
    %v693 = vsub.f32 %v666, %v626
    %v694 = vsub.f32 %v666, %v627
    %v695 = vsub.f32 %v666, %v628
    %v696 = vsub.f32 %v666, %v629
    %v697 = vsub.f32 %v666, %v630
    %v698 = vsub.f32 %v666, %v631
    %v699 = vsub.f32 %v666, %v632
    %v700 = vsub.f32 %v666, %v633
    %v701 = vsub.f32 %v666, %v634
    %v702 = vsub.f32 %v666, %v635
    %v703 = vsub.f32 %v666, %v636
    %v704 = vsub.f32 %v666, %v637
    %v705 = vsub.f32 %v666, %v638
    %v706 = vsub.f32 %v666, %v639
    %v707 = vsub.f32 %v666, %v640
    %v708 = vsub.f32 %v666, %v641
    %v709 = vsub.f32 %v666, %v642
    %v710 = vsub.f32 %v666, %v643
    %v711 = vsub.f32 %v666, %v644
    %v712 = vsub.f32 %v666, %v645
    %v713 = vsub.f32 %v666, %v646
    %v714 = vsub.f32 %v666, %v647
    %v715 = vsub.f32 %v666, %v648
    %v716 = vsub.f32 %v666, %v649
    %v717 = vsub.f32 %v666, %v650
    %v718 = vsub.f32 %v666, %v651
    %v719 = vsub.f32 %v666, %v652
    %v720 = vsub.f32 %v666, %v653
    %v721 = vsub.f32 %v666, %v654
    %v722 = vsub.f32 %v666, %v655
    %v723 = vsub.f32 %v666, %v656
    %v724 = vsub.f32 %v666, %v657
    %v725 = vsub.f32 %v666, %v658
    %v726 = vsub.f32 %v666, %v659
    %v727 = vsub.f32 %v666, %v660
    %v728 = vsub.f32 %v666, %v661
    %v729 = vsub.f32 %v666, %v662
    %v730 = vsub.f32 %v666, %v663
    %v731 = vsub.f32 %v666, %v664
    %732 = vmin.index.xlane.f32.xlu0 %v668
    %v733 = vpop.xlane.xlu0 %732
    %734 = vmin.index.xlane.f32.xlu0 %v669
    %v735 = vpop.xlane.xlu0 %734
    %736 = vmin.index.xlane.f32.xlu0 %v670
    %v737 = vpop.xlane.xlu0 %736
    %738 = vmin.index.xlane.f32.xlu0 %v671
    %v739 = vpop.xlane.xlu0 %738
    %740 = vmin.index.xlane.f32.xlu0 %v672
    %v741 = vpop.xlane.xlu0 %740
    %742 = vmin.index.xlane.f32.xlu0 %v673
    %v743 = vpop.xlane.xlu0 %742
    %744 = vmin.index.xlane.f32.xlu0 %v674
    %v745 = vpop.xlane.xlu0 %744
    %746 = vmin.index.xlane.f32.xlu0 %v675
    %v747 = vpop.xlane.xlu0 %746
    %748 = vmin.index.xlane.f32.xlu0 %v676
    %v749 = vpop.xlane.xlu0 %748
    %750 = vmin.index.xlane.f32.xlu0 %v677
    %v751 = vpop.xlane.xlu0 %750
    %752 = vmin.index.xlane.f32.xlu0 %v678
    %v753 = vpop.xlane.xlu0 %752
    %754 = vmin.index.xlane.f32.xlu0 %v679
    %v755 = vpop.xlane.xlu0 %754
    %756 = vmin.index.xlane.f32.xlu0 %v680
    %v757 = vpop.xlane.xlu0 %756
    %758 = vmin.index.xlane.f32.xlu0 %v681
    %v759 = vpop.xlane.xlu0 %758
    %760 = vmin.index.xlane.f32.xlu0 %v682
    %v761 = vpop.xlane.xlu0 %760
    %762 = vmin.index.xlane.f32.xlu0 %v683
    %v763 = vpop.xlane.xlu0 %762
    %764 = vmin.index.xlane.f32.xlu0 %v684
    %v765 = vpop.xlane.xlu0 %764
    %766 = vmin.index.xlane.f32.xlu0 %v685
    %v767 = vpop.xlane.xlu0 %766
    %768 = vmin.index.xlane.f32.xlu0 %v686
    %v769 = vpop.xlane.xlu0 %768
    %770 = vmin.index.xlane.f32.xlu0 %v687
    %v771 = vpop.xlane.xlu0 %770
    %772 = vmin.index.xlane.f32.xlu0 %v688
    %v773 = vpop.xlane.xlu0 %772
    %774 = vmin.index.xlane.f32.xlu0 %v689
    %v775 = vpop.xlane.xlu0 %774
    %776 = vmin.index.xlane.f32.xlu0 %v690
    %v777 = vpop.xlane.xlu0 %776
    %778 = vmin.index.xlane.f32.xlu0 %v691
    %v779 = vpop.xlane.xlu0 %778
    %780 = vmin.index.xlane.f32.xlu0 %v692
    %v781 = vpop.xlane.xlu0 %780
    %782 = vmin.index.xlane.f32.xlu0 %v693
    %v783 = vpop.xlane.xlu0 %782
    %784 = vmin.index.xlane.f32.xlu0 %v694
    %v785 = vpop.xlane.xlu0 %784
    %786 = vmin.index.xlane.f32.xlu0 %v695
    %v787 = vpop.xlane.xlu0 %786
    %788 = vmin.index.xlane.f32.xlu0 %v696
    %v789 = vpop.xlane.xlu0 %788
    %790 = vmin.index.xlane.f32.xlu0 %v697
    %v791 = vpop.xlane.xlu0 %790
    %792 = vmin.index.xlane.f32.xlu0 %v698
    %v793 = vpop.xlane.xlu0 %792
    %794 = vmin.index.xlane.f32.xlu0 %v699
    %v795 = vpop.xlane.xlu0 %794
    %796 = vmin.index.xlane.f32.xlu0 %v700
    %v797 = vpop.xlane.xlu0 %796
    %798 = vmin.index.xlane.f32.xlu0 %v701
    %v799 = vpop.xlane.xlu0 %798
    %800 = vmin.index.xlane.f32.xlu0 %v702
    %v801 = vpop.xlane.xlu0 %800
    %802 = vmin.index.xlane.f32.xlu0 %v703
    %v803 = vpop.xlane.xlu0 %802
    %804 = vmin.index.xlane.f32.xlu0 %v704
    %v805 = vpop.xlane.xlu0 %804
    %806 = vmin.index.xlane.f32.xlu0 %v705
    %v807 = vpop.xlane.xlu0 %806
    %808 = vmin.index.xlane.f32.xlu0 %v706
    %v809 = vpop.xlane.xlu0 %808
    %810 = vmin.index.xlane.f32.xlu0 %v707
    %v811 = vpop.xlane.xlu0 %810
    %812 = vmin.index.xlane.f32.xlu0 %v708
    %v813 = vpop.xlane.xlu0 %812
    %814 = vmin.index.xlane.f32.xlu0 %v709
    %v815 = vpop.xlane.xlu0 %814
    %816 = vmin.index.xlane.f32.xlu0 %v710
    %v817 = vpop.xlane.xlu0 %816
    %818 = vmin.index.xlane.f32.xlu0 %v711
    %v819 = vpop.xlane.xlu0 %818
    %820 = vmin.index.xlane.f32.xlu0 %v712
    %v821 = vpop.xlane.xlu0 %820
    %822 = vmin.index.xlane.f32.xlu0 %v713
    %v823 = vpop.xlane.xlu0 %822
    %824 = vmin.index.xlane.f32.xlu0 %v714
    %v825 = vpop.xlane.xlu0 %824
    %826 = vmin.index.xlane.f32.xlu0 %v715
    %v827 = vpop.xlane.xlu0 %826
    %828 = vmin.index.xlane.f32.xlu0 %v716
    %v829 = vpop.xlane.xlu0 %828
    %830 = vmin.index.xlane.f32.xlu0 %v717
    %v831 = vpop.xlane.xlu0 %830
    %832 = vmin.index.xlane.f32.xlu0 %v718
    %v833 = vpop.xlane.xlu0 %832
    %834 = vmin.index.xlane.f32.xlu0 %v719
    %v835 = vpop.xlane.xlu0 %834
    %836 = vmin.index.xlane.f32.xlu0 %v720
    %v837 = vpop.xlane.xlu0 %836
    %838 = vmin.index.xlane.f32.xlu0 %v721
    %v839 = vpop.xlane.xlu0 %838
    %840 = vmin.index.xlane.f32.xlu0 %v722
    %v841 = vpop.xlane.xlu0 %840
    %842 = vmin.index.xlane.f32.xlu0 %v723
    %v843 = vpop.xlane.xlu0 %842
    %844 = vmin.index.xlane.f32.xlu0 %v724
    %v845 = vpop.xlane.xlu0 %844
    %846 = vmin.index.xlane.f32.xlu0 %v725
    %v847 = vpop.xlane.xlu0 %846
    %848 = vmin.index.xlane.f32.xlu0 %v726
    %v849 = vpop.xlane.xlu0 %848
    %850 = vmin.index.xlane.f32.xlu0 %v727
    %v851 = vpop.xlane.xlu0 %850
    %852 = vmin.index.xlane.f32.xlu0 %v728
    %v853 = vpop.xlane.xlu0 %852
    %854 = vmin.index.xlane.f32.xlu0 %v729
    %v855 = vpop.xlane.xlu0 %854
    %856 = vmin.index.xlane.f32.xlu0 %v730
    %v857 = vpop.xlane.xlu0 %856
    %858 = vmin.index.xlane.f32.xlu0 %v731
    %v859 = vpop.xlane.xlu0 %858
    %v860 = vlaneseq
    %v861 = vand.u32 %v860, 127
    %vm862 = vcmp.eq.s32.totalorder %v733, %v861
    %vm863 = vcmp.eq.s32.totalorder %v735, %v861
    %vm864 = vcmp.eq.s32.totalorder %v737, %v861
    %vm865 = vcmp.eq.s32.totalorder %v739, %v861
    %vm866 = vcmp.eq.s32.totalorder %v741, %v861
    %vm867 = vcmp.eq.s32.totalorder %v743, %v861
    %vm868 = vcmp.eq.s32.totalorder %v745, %v861
    %vm869 = vcmp.eq.s32.totalorder %v747, %v861
    %vm870 = vcmp.eq.s32.totalorder %v749, %v861
    %vm871 = vcmp.eq.s32.totalorder %v751, %v861
    %vm872 = vcmp.eq.s32.totalorder %v753, %v861
    %vm873 = vcmp.eq.s32.totalorder %v755, %v861
    %vm874 = vcmp.eq.s32.totalorder %v757, %v861
    %vm875 = vcmp.eq.s32.totalorder %v759, %v861
    %vm876 = vcmp.eq.s32.totalorder %v761, %v861
    %vm877 = vcmp.eq.s32.totalorder %v763, %v861
    %vm878 = vcmp.eq.s32.totalorder %v765, %v861
    %vm879 = vcmp.eq.s32.totalorder %v767, %v861
    %vm880 = vcmp.eq.s32.totalorder %v769, %v861
    %vm881 = vcmp.eq.s32.totalorder %v771, %v861
    %vm882 = vcmp.eq.s32.totalorder %v773, %v861
    %vm883 = vcmp.eq.s32.totalorder %v775, %v861
    %vm884 = vcmp.eq.s32.totalorder %v777, %v861
    %vm885 = vcmp.eq.s32.totalorder %v779, %v861
    %vm886 = vcmp.eq.s32.totalorder %v781, %v861
    %vm887 = vcmp.eq.s32.totalorder %v783, %v861
    %vm888 = vcmp.eq.s32.totalorder %v785, %v861
    %vm889 = vcmp.eq.s32.totalorder %v787, %v861
    %vm890 = vcmp.eq.s32.totalorder %v789, %v861
    %vm891 = vcmp.eq.s32.totalorder %v791, %v861
    %vm892 = vcmp.eq.s32.totalorder %v793, %v861
    %vm893 = vcmp.eq.s32.totalorder %v795, %v861
    %vm894 = vcmp.eq.s32.totalorder %v797, %v861
    %vm895 = vcmp.eq.s32.totalorder %v799, %v861
    %vm896 = vcmp.eq.s32.totalorder %v801, %v861
    %vm897 = vcmp.eq.s32.totalorder %v803, %v861
    %vm898 = vcmp.eq.s32.totalorder %v805, %v861
    %vm899 = vcmp.eq.s32.totalorder %v807, %v861
    %vm900 = vcmp.eq.s32.totalorder %v809, %v861
    %vm901 = vcmp.eq.s32.totalorder %v811, %v861
    %vm902 = vcmp.eq.s32.totalorder %v813, %v861
    %vm903 = vcmp.eq.s32.totalorder %v815, %v861
    %vm904 = vcmp.eq.s32.totalorder %v817, %v861
    %vm905 = vcmp.eq.s32.totalorder %v819, %v861
    %vm906 = vcmp.eq.s32.totalorder %v821, %v861
    %vm907 = vcmp.eq.s32.totalorder %v823, %v861
    %vm908 = vcmp.eq.s32.totalorder %v825, %v861
    %vm909 = vcmp.eq.s32.totalorder %v827, %v861
    %vm910 = vcmp.eq.s32.totalorder %v829, %v861
    %vm911 = vcmp.eq.s32.totalorder %v831, %v861
    %vm912 = vcmp.eq.s32.totalorder %v833, %v861
    %vm913 = vcmp.eq.s32.totalorder %v835, %v861
    %vm914 = vcmp.eq.s32.totalorder %v837, %v861
    %vm915 = vcmp.eq.s32.totalorder %v839, %v861
    %vm916 = vcmp.eq.s32.totalorder %v841, %v861
    %vm917 = vcmp.eq.s32.totalorder %v843, %v861
    %vm918 = vcmp.eq.s32.totalorder %v845, %v861
    %vm919 = vcmp.eq.s32.totalorder %v847, %v861
    %vm920 = vcmp.eq.s32.totalorder %v849, %v861
    %vm921 = vcmp.eq.s32.totalorder %v851, %v861
    %vm922 = vcmp.eq.s32.totalorder %v853, %v861
    %vm923 = vcmp.eq.s32.totalorder %v855, %v861
    %vm924 = vcmp.eq.s32.totalorder %v857, %v861
    %vm925 = vcmp.eq.s32.totalorder %v859, %v861
    %v926 = vsel %vm862, 1, 0
    %v927 = vsel %vm863, 1, 0
    %v928 = vsel %vm864, 1, 0
    %v929 = vsel %vm865, 1, 0
    %v930 = vsel %vm866, 1, 0
    %v931 = vsel %vm867, 1, 0
    %v932 = vsel %vm868, 1, 0
    %v933 = vsel %vm869, 1, 0
    %v934 = vsel %vm870, 1, 0
    %v935 = vsel %vm871, 1, 0
    %v936 = vsel %vm872, 1, 0
    %v937 = vsel %vm873, 1, 0
    %v938 = vsel %vm874, 1, 0
    %v939 = vsel %vm875, 1, 0
    %v940 = vsel %vm876, 1, 0
    %v941 = vsel %vm877, 1, 0
    %v942 = vsel %vm878, 1, 0
    %v943 = vsel %vm879, 1, 0
    %v944 = vsel %vm880, 1, 0
    %v945 = vsel %vm881, 1, 0
    %v946 = vsel %vm882, 1, 0
    %v947 = vsel %vm883, 1, 0
    %v948 = vsel %vm884, 1, 0
    %v949 = vsel %vm885, 1, 0
    %v950 = vsel %vm886, 1, 0
    %v951 = vsel %vm887, 1, 0
    %v952 = vsel %vm888, 1, 0
    %v953 = vsel %vm889, 1, 0
    %v954 = vsel %vm890, 1, 0
    %v955 = vsel %vm891, 1, 0
    %v956 = vsel %vm892, 1, 0
    %v957 = vsel %vm893, 1, 0
    %v958 = vsel %vm894, 1, 0
    %v959 = vsel %vm895, 1, 0
    %v960 = vsel %vm896, 1, 0
    %v961 = vsel %vm897, 1, 0
    %v962 = vsel %vm898, 1, 0
    %v963 = vsel %vm899, 1, 0
    %v964 = vsel %vm900, 1, 0
    %v965 = vsel %vm901, 1, 0
    %v966 = vsel %vm902, 1, 0
    %v967 = vsel %vm903, 1, 0
    %v968 = vsel %vm904, 1, 0
    %v969 = vsel %vm905, 1, 0
    %v970 = vsel %vm906, 1, 0
    %v971 = vsel %vm907, 1, 0
    %v972 = vsel %vm908, 1, 0
    %v973 = vsel %vm909, 1, 0
    %v974 = vsel %vm910, 1, 0
    %v975 = vsel %vm911, 1, 0
    %v976 = vsel %vm912, 1, 0
    %v977 = vsel %vm913, 1, 0
    %v978 = vsel %vm914, 1, 0
    %v979 = vsel %vm915, 1, 0
    %v980 = vsel %vm916, 1, 0
    %v981 = vsel %vm917, 1, 0
    %v982 = vsel %vm918, 1, 0
    %v983 = vsel %vm919, 1, 0
    %v984 = vsel %vm920, 1, 0
    %v985 = vsel %vm921, 1, 0
    %v986 = vsel %vm922, 1, 0
    %v987 = vsel %vm923, 1, 0
    %v988 = vsel %vm924, 1, 0
    %v989 = vsel %vm925, 1, 0
    %v990 = vcvt.s32.f32 %v926
    %v991 = vcvt.s32.f32 %v927
    %v992 = vcvt.s32.f32 %v928
    %v993 = vcvt.s32.f32 %v929
    %v994 = vcvt.s32.f32 %v930
    %v995 = vcvt.s32.f32 %v931
    %v996 = vcvt.s32.f32 %v932
    %v997 = vcvt.s32.f32 %v933
    %v998 = vcvt.s32.f32 %v934
    %v999 = vcvt.s32.f32 %v935
    %v1000 = vcvt.s32.f32 %v936
    %v1001 = vcvt.s32.f32 %v937
    %v1002 = vcvt.s32.f32 %v938
    %v1003 = vcvt.s32.f32 %v939
    %v1004 = vcvt.s32.f32 %v940
    %v1005 = vcvt.s32.f32 %v941
    %v1006 = vcvt.s32.f32 %v942
    %v1007 = vcvt.s32.f32 %v943
    %v1008 = vcvt.s32.f32 %v944
    %v1009 = vcvt.s32.f32 %v945
    %v1010 = vcvt.s32.f32 %v946
    %v1011 = vcvt.s32.f32 %v947
    %v1012 = vcvt.s32.f32 %v948
    %v1013 = vcvt.s32.f32 %v949
    %v1014 = vcvt.s32.f32 %v950
    %v1015 = vcvt.s32.f32 %v951
    %v1016 = vcvt.s32.f32 %v952
    %v1017 = vcvt.s32.f32 %v953
    %v1018 = vcvt.s32.f32 %v954
    %v1019 = vcvt.s32.f32 %v955
    %v1020 = vcvt.s32.f32 %v956
    %v1021 = vcvt.s32.f32 %v957
    %v1022 = vcvt.s32.f32 %v958
    %v1023 = vcvt.s32.f32 %v959
    %v1024 = vcvt.s32.f32 %v960
    %v1025 = vcvt.s32.f32 %v961
    %v1026 = vcvt.s32.f32 %v962
    %v1027 = vcvt.s32.f32 %v963
    %v1028 = vcvt.s32.f32 %v964
    %v1029 = vcvt.s32.f32 %v965
    %v1030 = vcvt.s32.f32 %v966
    %v1031 = vcvt.s32.f32 %v967
    %v1032 = vcvt.s32.f32 %v968
    %v1033 = vcvt.s32.f32 %v969
    %v1034 = vcvt.s32.f32 %v970
    %v1035 = vcvt.s32.f32 %v971
    %v1036 = vcvt.s32.f32 %v972
    %v1037 = vcvt.s32.f32 %v973
    %v1038 = vcvt.s32.f32 %v974
    %v1039 = vcvt.s32.f32 %v975
    %v1040 = vcvt.s32.f32 %v976
    %v1041 = vcvt.s32.f32 %v977
    %v1042 = vcvt.s32.f32 %v978
    %v1043 = vcvt.s32.f32 %v979
    %v1044 = vcvt.s32.f32 %v980
    %v1045 = vcvt.s32.f32 %v981
    %v1046 = vcvt.s32.f32 %v982
    %v1047 = vcvt.s32.f32 %v983
    %v1048 = vcvt.s32.f32 %v984
    %v1049 = vcvt.s32.f32 %v985
    %v1050 = vcvt.s32.f32 %v986
    %v1051 = vcvt.s32.f32 %v987
    %v1052 = vcvt.s32.f32 %v988
    %v1053 = vcvt.s32.f32 %v989
    %1054 = vmatpush.msra.mxu0 %v149
    %1055 = vmatpush.msra.mxu0 %v148
    %1056 = vmatpush.msra.mxu0 %v147
    %1057 = vmatpush.msra.mxu0 %v146
    %1058 = vmatpush.msra.mxu0 %v145
    %1059 = vmatpush.msra.mxu0 %v144
    %1060 = vmatpush.msra.mxu0 %v143
    %1061 = vmatpush.msra.mxu0 %v142
    %1062 = vmatpush.msra.mxu0 %v141
    %1063 = vmatpush.msra.mxu0 %v140
    %1064 = vmatpush.msra.mxu0 %v139
    %1065 = vmatpush.msra.mxu0 %v138
    %1066 = vmatpush.msra.mxu0 %v137
    %1067 = vmatpush.msra.mxu0 %v136
    %1068 = vmatpush.msra.mxu0 %v135
    %1069 = vmatpush.msra.mxu0 %v134
    %1070 = vmatmul.f32.gmra.mxu0 %v990
    %v1071 = vpop.f32.mrf.mxu0
    %v1072 = vadd.f32 0.0, %v1071
    %1073 = vmatmul.f32.gmra.mxu0 %v991
    %v1074 = vpop.f32.mrf.mxu0
    %v1075 = vadd.f32 0.0, %v1074
    %1076 = vmatmul.f32.gmra.mxu0 %v992
    %v1077 = vpop.f32.mrf.mxu0
    %v1078 = vadd.f32 0.0, %v1077
    %1079 = vmatmul.f32.gmra.mxu0 %v993
    %v1080 = vpop.f32.mrf.mxu0
    %v1081 = vadd.f32 0.0, %v1080
    %1082 = vmatmul.f32.gmra.mxu0 %v994
    %v1083 = vpop.f32.mrf.mxu0
    %v1084 = vadd.f32 0.0, %v1083
    %1085 = vmatmul.f32.gmra.mxu0 %v995
    %v1086 = vpop.f32.mrf.mxu0
    %v1087 = vadd.f32 0.0, %v1086
    %1088 = vmatmul.f32.gmra.mxu0 %v996
    %v1089 = vpop.f32.mrf.mxu0
    %v1090 = vadd.f32 0.0, %v1089
    %1091 = vmatmul.f32.gmra.mxu0 %v997
    %v1092 = vpop.f32.mrf.mxu0
    %v1093 = vadd.f32 0.0, %v1092
    %1094 = vmatmul.f32.gmra.mxu0 %v998
    %v1095 = vpop.f32.mrf.mxu0
    %v1096 = vadd.f32 0.0, %v1095
    %1097 = vmatmul.f32.gmra.mxu0 %v999
    %v1098 = vpop.f32.mrf.mxu0
    %v1099 = vadd.f32 0.0, %v1098
    %1100 = vmatmul.f32.gmra.mxu0 %v1000
    %v1101 = vpop.f32.mrf.mxu0
    %v1102 = vadd.f32 0.0, %v1101
    %1103 = vmatmul.f32.gmra.mxu0 %v1001
    %v1104 = vpop.f32.mrf.mxu0
    %v1105 = vadd.f32 0.0, %v1104
    %1106 = vmatmul.f32.gmra.mxu0 %v1002
    %v1107 = vpop.f32.mrf.mxu0
    %v1108 = vadd.f32 0.0, %v1107
    %1109 = vmatmul.f32.gmra.mxu0 %v1003
    %v1110 = vpop.f32.mrf.mxu0
    %v1111 = vadd.f32 0.0, %v1110
    %1112 = vmatmul.f32.gmra.mxu0 %v1004
    %v1113 = vpop.f32.mrf.mxu0
    %v1114 = vadd.f32 0.0, %v1113
    %1115 = vmatmul.f32.gmra.mxu0 %v1005
    %v1116 = vpop.f32.mrf.mxu0
    %v1117 = vadd.f32 0.0, %v1116
    %1118 = vmatmul.f32.gmra.mxu0 %v1006
    %v1119 = vpop.f32.mrf.mxu0
    %v1120 = vadd.f32 0.0, %v1119
    %1121 = vmatmul.f32.gmra.mxu0 %v1007
    %v1122 = vpop.f32.mrf.mxu0
    %v1123 = vadd.f32 0.0, %v1122
    %1124 = vmatmul.f32.gmra.mxu0 %v1008
    %v1125 = vpop.f32.mrf.mxu0
    %v1126 = vadd.f32 0.0, %v1125
    %1127 = vmatmul.f32.gmra.mxu0 %v1009
    %v1128 = vpop.f32.mrf.mxu0
    %v1129 = vadd.f32 0.0, %v1128
    %1130 = vmatmul.f32.gmra.mxu0 %v1010
    %v1131 = vpop.f32.mrf.mxu0
    %v1132 = vadd.f32 0.0, %v1131
    %1133 = vmatmul.f32.gmra.mxu0 %v1011
    %v1134 = vpop.f32.mrf.mxu0
    %v1135 = vadd.f32 0.0, %v1134
    %1136 = vmatmul.f32.gmra.mxu0 %v1012
    %v1137 = vpop.f32.mrf.mxu0
    %v1138 = vadd.f32 0.0, %v1137
    %1139 = vmatmul.f32.gmra.mxu0 %v1013
    %v1140 = vpop.f32.mrf.mxu0
    %v1141 = vadd.f32 0.0, %v1140
    %1142 = vmatmul.f32.gmra.mxu0 %v1014
    %v1143 = vpop.f32.mrf.mxu0
    %v1144 = vadd.f32 0.0, %v1143
    %1145 = vmatmul.f32.gmra.mxu0 %v1015
    %v1146 = vpop.f32.mrf.mxu0
    %v1147 = vadd.f32 0.0, %v1146
    %1148 = vmatmul.f32.gmra.mxu0 %v1016
    %v1149 = vpop.f32.mrf.mxu0
    %v1150 = vadd.f32 0.0, %v1149
    %1151 = vmatmul.f32.gmra.mxu0 %v1017
    %v1152 = vpop.f32.mrf.mxu0
    %v1153 = vadd.f32 0.0, %v1152
    %1154 = vmatmul.f32.gmra.mxu0 %v1018
    %v1155 = vpop.f32.mrf.mxu0
    %v1156 = vadd.f32 0.0, %v1155
    %1157 = vmatmul.f32.gmra.mxu0 %v1019
    %v1158 = vpop.f32.mrf.mxu0
    %v1159 = vadd.f32 0.0, %v1158
    %1160 = vmatmul.f32.gmra.mxu0 %v1020
    %v1161 = vpop.f32.mrf.mxu0
    %v1162 = vadd.f32 0.0, %v1161
    %1163 = vmatmul.f32.gmra.mxu0 %v1021
    %v1164 = vpop.f32.mrf.mxu0
    %v1165 = vadd.f32 0.0, %v1164
    %1166 = vmatmul.f32.gmra.mxu0 %v1022
    %v1167 = vpop.f32.mrf.mxu0
    %v1168 = vadd.f32 0.0, %v1167
    %1169 = vmatmul.f32.gmra.mxu0 %v1023
    %v1170 = vpop.f32.mrf.mxu0
    %v1171 = vadd.f32 0.0, %v1170
    %1172 = vmatmul.f32.gmra.mxu0 %v1024
    %v1173 = vpop.f32.mrf.mxu0
    %v1174 = vadd.f32 0.0, %v1173
    %1175 = vmatmul.f32.gmra.mxu0 %v1025
    %v1176 = vpop.f32.mrf.mxu0
    %v1177 = vadd.f32 0.0, %v1176
    %1178 = vmatmul.f32.gmra.mxu0 %v1026
    %v1179 = vpop.f32.mrf.mxu0
    %v1180 = vadd.f32 0.0, %v1179
    %1181 = vmatmul.f32.gmra.mxu0 %v1027
    %v1182 = vpop.f32.mrf.mxu0
    %v1183 = vadd.f32 0.0, %v1182
    %1184 = vmatmul.f32.gmra.mxu0 %v1028
    %v1185 = vpop.f32.mrf.mxu0
    %v1186 = vadd.f32 0.0, %v1185
    %1187 = vmatmul.f32.gmra.mxu0 %v1029
    %v1188 = vpop.f32.mrf.mxu0
    %v1189 = vadd.f32 0.0, %v1188
    %1190 = vmatmul.f32.gmra.mxu0 %v1030
    %v1191 = vpop.f32.mrf.mxu0
    %v1192 = vadd.f32 0.0, %v1191
    %1193 = vmatmul.f32.gmra.mxu0 %v1031
    %v1194 = vpop.f32.mrf.mxu0
    %v1195 = vadd.f32 0.0, %v1194
    %1196 = vmatmul.f32.gmra.mxu0 %v1032
    %v1197 = vpop.f32.mrf.mxu0
    %v1198 = vadd.f32 0.0, %v1197
    %1199 = vmatmul.f32.gmra.mxu0 %v1033
    %v1200 = vpop.f32.mrf.mxu0
    %v1201 = vadd.f32 0.0, %v1200
    %1202 = vmatmul.f32.gmra.mxu0 %v1034
    %v1203 = vpop.f32.mrf.mxu0
    %v1204 = vadd.f32 0.0, %v1203
    %1205 = vmatmul.f32.gmra.mxu0 %v1035
    %v1206 = vpop.f32.mrf.mxu0
    %v1207 = vadd.f32 0.0, %v1206
    %1208 = vmatmul.f32.gmra.mxu0 %v1036
    %v1209 = vpop.f32.mrf.mxu0
    %v1210 = vadd.f32 0.0, %v1209
    %1211 = vmatmul.f32.gmra.mxu0 %v1037
    %v1212 = vpop.f32.mrf.mxu0
    %v1213 = vadd.f32 0.0, %v1212
    %1214 = vmatmul.f32.gmra.mxu0 %v1038
    %v1215 = vpop.f32.mrf.mxu0
    %v1216 = vadd.f32 0.0, %v1215
    %1217 = vmatmul.f32.gmra.mxu0 %v1039
    %v1218 = vpop.f32.mrf.mxu0
    %v1219 = vadd.f32 0.0, %v1218
    %1220 = vmatmul.f32.gmra.mxu0 %v1040
    %v1221 = vpop.f32.mrf.mxu0
    %v1222 = vadd.f32 0.0, %v1221
    %1223 = vmatmul.f32.gmra.mxu0 %v1041
    %v1224 = vpop.f32.mrf.mxu0
    %v1225 = vadd.f32 0.0, %v1224
    %1226 = vmatmul.f32.gmra.mxu0 %v1042
    %v1227 = vpop.f32.mrf.mxu0
    %v1228 = vadd.f32 0.0, %v1227
    %1229 = vmatmul.f32.gmra.mxu0 %v1043
    %v1230 = vpop.f32.mrf.mxu0
    %v1231 = vadd.f32 0.0, %v1230
    %1232 = vmatmul.f32.gmra.mxu0 %v1044
    %v1233 = vpop.f32.mrf.mxu0
    %v1234 = vadd.f32 0.0, %v1233
    %1235 = vmatmul.f32.gmra.mxu0 %v1045
    %v1236 = vpop.f32.mrf.mxu0
    %v1237 = vadd.f32 0.0, %v1236
    %1238 = vmatmul.f32.gmra.mxu0 %v1046
    %v1239 = vpop.f32.mrf.mxu0
    %v1240 = vadd.f32 0.0, %v1239
    %1241 = vmatmul.f32.gmra.mxu0 %v1047
    %v1242 = vpop.f32.mrf.mxu0
    %v1243 = vadd.f32 0.0, %v1242
    %1244 = vmatmul.f32.gmra.mxu0 %v1048
    %v1245 = vpop.f32.mrf.mxu0
    %v1246 = vadd.f32 0.0, %v1245
    %1247 = vmatmul.f32.gmra.mxu0 %v1049
    %v1248 = vpop.f32.mrf.mxu0
    %v1249 = vadd.f32 0.0, %v1248
    %1250 = vmatmul.f32.gmra.mxu0 %v1050
    %v1251 = vpop.f32.mrf.mxu0
    %v1252 = vadd.f32 0.0, %v1251
    %1253 = vmatmul.f32.gmra.mxu0 %v1051
    %v1254 = vpop.f32.mrf.mxu0
    %v1255 = vadd.f32 0.0, %v1254
    %1256 = vmatmul.f32.gmra.mxu0 %v1052
    %v1257 = vpop.f32.mrf.mxu0
    %v1258 = vadd.f32 0.0, %v1257
    %1259 = vmatmul.f32.gmra.mxu0 %v1053
    %v1260 = vpop.f32.mrf.mxu0
    %v1261 = vadd.f32 0.0, %v1260
    %1262 = vdwg.mxu0
    %1263 = vst.msk [vmem:[%s59] sm:$0xff] %vm151, %v1072
    %1264 = vst.msk [vmem:[%s59 + $0x8] sm:$0xff] %vm151, %v1075
    %1265 = vst.msk [vmem:[%s59 + $0x10] sm:$0xff] %vm151, %v1078
    %1266 = vst.msk [vmem:[%s59 + $0x18] sm:$0xff] %vm151, %v1081
    %1267 = vst.msk [vmem:[%s59 + $0x20] sm:$0xff] %vm151, %v1084
    %1268 = vst.msk [vmem:[%s59 + $0x28] sm:$0xff] %vm151, %v1087
    %1269 = vst.msk [vmem:[%s59 + $0x30] sm:$0xff] %vm151, %v1090
    %1270 = vst.msk [vmem:[%s59 + $0x38] sm:$0xff] %vm151, %v1093
    %1271 = vst.msk [vmem:[%s59 + $0x40] sm:$0xff] %vm151, %v1096
    %1272 = vst.msk [vmem:[%s59 + $0x48] sm:$0xff] %vm151, %v1099
    %1273 = vst.msk [vmem:[%s59 + $0x50] sm:$0xff] %vm151, %v1102
    %1274 = vst.msk [vmem:[%s59 + $0x58] sm:$0xff] %vm151, %v1105
    %1275 = vst.msk [vmem:[%s59 + $0x60] sm:$0xff] %vm151, %v1108
    %1276 = vst.msk [vmem:[%s59 + $0x68] sm:$0xff] %vm151, %v1111
    %1277 = vst.msk [vmem:[%s59 + $0x70] sm:$0xff] %vm151, %v1114
    %1278 = vst.msk [vmem:[%s59 + $0x78] sm:$0xff] %vm151, %v1117
    %1279 = vst.msk [vmem:[%s59 + $0x80] sm:$0xff] %vm151, %v1120
    %1280 = vst.msk [vmem:[%s59 + $0x88] sm:$0xff] %vm151, %v1123
    %1281 = vst.msk [vmem:[%s59 + $0x90] sm:$0xff] %vm151, %v1126
    %1282 = vst.msk [vmem:[%s59 + $0x98] sm:$0xff] %vm151, %v1129
    %1283 = vst.msk [vmem:[%s59 + $0xa0] sm:$0xff] %vm151, %v1132
    %1284 = vst.msk [vmem:[%s59 + $0xa8] sm:$0xff] %vm151, %v1135
    %1285 = vst.msk [vmem:[%s59 + $0xb0] sm:$0xff] %vm151, %v1138
    %1286 = vst.msk [vmem:[%s59 + $0xb8] sm:$0xff] %vm151, %v1141
    %1287 = vst.msk [vmem:[%s59 + $0xc0] sm:$0xff] %vm151, %v1144
    %1288 = vst.msk [vmem:[%s59 + $0xc8] sm:$0xff] %vm151, %v1147
    %1289 = vst.msk [vmem:[%s59 + $0xd0] sm:$0xff] %vm151, %v1150
    %1290 = vst.msk [vmem:[%s59 + $0xd8] sm:$0xff] %vm151, %v1153
    %1291 = vst.msk [vmem:[%s59 + $0xe0] sm:$0xff] %vm151, %v1156
    %1292 = vst.msk [vmem:[%s59 + $0xe8] sm:$0xff] %vm151, %v1159
    %1293 = vst.msk [vmem:[%s59 + $0xf0] sm:$0xff] %vm151, %v1162
    %1294 = vst.msk [vmem:[%s59 + $0xf8] sm:$0xff] %vm151, %v1165
    %1295 = vst.msk [vmem:[%s59 + $0x100] sm:$0xff] %vm151, %v1168
    %1296 = vst.msk [vmem:[%s59 + $0x108] sm:$0xff] %vm151, %v1171
    %1297 = vst.msk [vmem:[%s59 + $0x110] sm:$0xff] %vm151, %v1174
    %1298 = vst.msk [vmem:[%s59 + $0x118] sm:$0xff] %vm151, %v1177
    %1299 = vst.msk [vmem:[%s59 + $0x120] sm:$0xff] %vm151, %v1180
    %1300 = vst.msk [vmem:[%s59 + $0x128] sm:$0xff] %vm151, %v1183
    %1301 = vst.msk [vmem:[%s59 + $0x130] sm:$0xff] %vm151, %v1186
    %1302 = vst.msk [vmem:[%s59 + $0x138] sm:$0xff] %vm151, %v1189
    %1303 = vst.msk [vmem:[%s59 + $0x140] sm:$0xff] %vm151, %v1192
    %1304 = vst.msk [vmem:[%s59 + $0x148] sm:$0xff] %vm151, %v1195
    %1305 = vst.msk [vmem:[%s59 + $0x150] sm:$0xff] %vm151, %v1198
    %1306 = vst.msk [vmem:[%s59 + $0x158] sm:$0xff] %vm151, %v1201
    %1307 = vst.msk [vmem:[%s59 + $0x160] sm:$0xff] %vm151, %v1204
    %1308 = vst.msk [vmem:[%s59 + $0x168] sm:$0xff] %vm151, %v1207
    %1309 = vst.msk [vmem:[%s59 + $0x170] sm:$0xff] %vm151, %v1210
    %1310 = vst.msk [vmem:[%s59 + $0x178] sm:$0xff] %vm151, %v1213
    %1311 = vst.msk [vmem:[%s59 + $0x180] sm:$0xff] %vm151, %v1216
    %1312 = vst.msk [vmem:[%s59 + $0x188] sm:$0xff] %vm151, %v1219
    %1313 = vst.msk [vmem:[%s59 + $0x190] sm:$0xff] %vm151, %v1222
    %1314 = vst.msk [vmem:[%s59 + $0x198] sm:$0xff] %vm151, %v1225
    %1315 = vst.msk [vmem:[%s59 + $0x1a0] sm:$0xff] %vm151, %v1228
    %1316 = vst.msk [vmem:[%s59 + $0x1a8] sm:$0xff] %vm151, %v1231
    %1317 = vst.msk [vmem:[%s59 + $0x1b0] sm:$0xff] %vm151, %v1234
    %1318 = vst.msk [vmem:[%s59 + $0x1b8] sm:$0xff] %vm151, %v1237
    %1319 = vst.msk [vmem:[%s59 + $0x1c0] sm:$0xff] %vm151, %v1240
    %1320 = vst.msk [vmem:[%s59 + $0x1c8] sm:$0xff] %vm151, %v1243
    %1321 = vst.msk [vmem:[%s59 + $0x1d0] sm:$0xff] %vm151, %v1246
    %1322 = vst.msk [vmem:[%s59 + $0x1d8] sm:$0xff] %vm151, %v1249
    %1323 = vst.msk [vmem:[%s59 + $0x1e0] sm:$0xff] %vm151, %v1252
    %1324 = vst.msk [vmem:[%s59 + $0x1e8] sm:$0xff] %vm151, %v1255
    %1325 = vst.msk [vmem:[%s59 + $0x1f0] sm:$0xff] %vm151, %v1258
    %1326 = vst.msk [vmem:[%s59 + $0x1f8] sm:$0xff] %vm151, %v1261
    %vm1327 = vcmask 7168
    %1328 = vst.msk [vmem:[%s67] sm:$0xff] %vm1327, %v733
    %1329 = vst.msk [vmem:[%s67 + $0x8] sm:$0xff] %vm1327, %v735
    %1330 = vst.msk [vmem:[%s67 + $0x10] sm:$0xff] %vm1327, %v737
    %1331 = vst.msk [vmem:[%s67 + $0x18] sm:$0xff] %vm1327, %v739
    %1332 = vst.msk [vmem:[%s67 + $0x20] sm:$0xff] %vm1327, %v741
    %1333 = vst.msk [vmem:[%s67 + $0x28] sm:$0xff] %vm1327, %v743
    %1334 = vst.msk [vmem:[%s67 + $0x30] sm:$0xff] %vm1327, %v745
    %1335 = vst.msk [vmem:[%s67 + $0x38] sm:$0xff] %vm1327, %v747
    %1336 = vst.msk [vmem:[%s67 + $0x40] sm:$0xff] %vm1327, %v749
    %1337 = vst.msk [vmem:[%s67 + $0x48] sm:$0xff] %vm1327, %v751
    %1338 = vst.msk [vmem:[%s67 + $0x50] sm:$0xff] %vm1327, %v753
    %1339 = vst.msk [vmem:[%s67 + $0x58] sm:$0xff] %vm1327, %v755
    %1340 = vst.msk [vmem:[%s67 + $0x60] sm:$0xff] %vm1327, %v757
    %1341 = vst.msk [vmem:[%s67 + $0x68] sm:$0xff] %vm1327, %v759
    %1342 = vst.msk [vmem:[%s67 + $0x70] sm:$0xff] %vm1327, %v761
    %1343 = vst.msk [vmem:[%s67 + $0x78] sm:$0xff] %vm1327, %v763
    %1344 = vst.msk [vmem:[%s67 + $0x80] sm:$0xff] %vm1327, %v765
    %1345 = vst.msk [vmem:[%s67 + $0x88] sm:$0xff] %vm1327, %v767
    %1346 = vst.msk [vmem:[%s67 + $0x90] sm:$0xff] %vm1327, %v769
    %1347 = vst.msk [vmem:[%s67 + $0x98] sm:$0xff] %vm1327, %v771
    %1348 = vst.msk [vmem:[%s67 + $0xa0] sm:$0xff] %vm1327, %v773
    %1349 = vst.msk [vmem:[%s67 + $0xa8] sm:$0xff] %vm1327, %v775
    %1350 = vst.msk [vmem:[%s67 + $0xb0] sm:$0xff] %vm1327, %v777
    %1351 = vst.msk [vmem:[%s67 + $0xb8] sm:$0xff] %vm1327, %v779
    %1352 = vst.msk [vmem:[%s67 + $0xc0] sm:$0xff] %vm1327, %v781
    %1353 = vst.msk [vmem:[%s67 + $0xc8] sm:$0xff] %vm1327, %v783
    %1354 = vst.msk [vmem:[%s67 + $0xd0] sm:$0xff] %vm1327, %v785
    %1355 = vst.msk [vmem:[%s67 + $0xd8] sm:$0xff] %vm1327, %v787
    %1356 = vst.msk [vmem:[%s67 + $0xe0] sm:$0xff] %vm1327, %v789
    %1357 = vst.msk [vmem:[%s67 + $0xe8] sm:$0xff] %vm1327, %v791
    %1358 = vst.msk [vmem:[%s67 + $0xf0] sm:$0xff] %vm1327, %v793
    %1359 = vst.msk [vmem:[%s67 + $0xf8] sm:$0xff] %vm1327, %v795
    %1360 = vst.msk [vmem:[%s67 + $0x100] sm:$0xff] %vm1327, %v797
    %1361 = vst.msk [vmem:[%s67 + $0x108] sm:$0xff] %vm1327, %v799
    %1362 = vst.msk [vmem:[%s67 + $0x110] sm:$0xff] %vm1327, %v801
    %1363 = vst.msk [vmem:[%s67 + $0x118] sm:$0xff] %vm1327, %v803
    %1364 = vst.msk [vmem:[%s67 + $0x120] sm:$0xff] %vm1327, %v805
    %1365 = vst.msk [vmem:[%s67 + $0x128] sm:$0xff] %vm1327, %v807
    %1366 = vst.msk [vmem:[%s67 + $0x130] sm:$0xff] %vm1327, %v809
    %1367 = vst.msk [vmem:[%s67 + $0x138] sm:$0xff] %vm1327, %v811
    %1368 = vst.msk [vmem:[%s67 + $0x140] sm:$0xff] %vm1327, %v813
    %1369 = vst.msk [vmem:[%s67 + $0x148] sm:$0xff] %vm1327, %v815
    %1370 = vst.msk [vmem:[%s67 + $0x150] sm:$0xff] %vm1327, %v817
    %1371 = vst.msk [vmem:[%s67 + $0x158] sm:$0xff] %vm1327, %v819
    %1372 = vst.msk [vmem:[%s67 + $0x160] sm:$0xff] %vm1327, %v821
    %1373 = vst.msk [vmem:[%s67 + $0x168] sm:$0xff] %vm1327, %v823
    %1374 = vst.msk [vmem:[%s67 + $0x170] sm:$0xff] %vm1327, %v825
    %1375 = vst.msk [vmem:[%s67 + $0x178] sm:$0xff] %vm1327, %v827
    %1376 = vst.msk [vmem:[%s67 + $0x180] sm:$0xff] %vm1327, %v829
    %1377 = vst.msk [vmem:[%s67 + $0x188] sm:$0xff] %vm1327, %v831
    %1378 = vst.msk [vmem:[%s67 + $0x190] sm:$0xff] %vm1327, %v833
    %1379 = vst.msk [vmem:[%s67 + $0x198] sm:$0xff] %vm1327, %v835
    %1380 = vst.msk [vmem:[%s67 + $0x1a0] sm:$0xff] %vm1327, %v837
    %1381 = vst.msk [vmem:[%s67 + $0x1a8] sm:$0xff] %vm1327, %v839
    %1382 = vst.msk [vmem:[%s67 + $0x1b0] sm:$0xff] %vm1327, %v841
    %1383 = vst.msk [vmem:[%s67 + $0x1b8] sm:$0xff] %vm1327, %v843
    %1384 = vst.msk [vmem:[%s67 + $0x1c0] sm:$0xff] %vm1327, %v845
    %1385 = vst.msk [vmem:[%s67 + $0x1c8] sm:$0xff] %vm1327, %v847
    %1386 = vst.msk [vmem:[%s67 + $0x1d0] sm:$0xff] %vm1327, %v849
    %1387 = vst.msk [vmem:[%s67 + $0x1d8] sm:$0xff] %vm1327, %v851
    %1388 = vst.msk [vmem:[%s67 + $0x1e0] sm:$0xff] %vm1327, %v853
    %1389 = vst.msk [vmem:[%s67 + $0x1e8] sm:$0xff] %vm1327, %v855
    %1390 = vst.msk [vmem:[%s67 + $0x1f0] sm:$0xff] %vm1327, %v857
    %1391 = vst.msk [vmem:[%s67 + $0x1f8] sm:$0xff] %vm1327, %v859
    %p1392 = scmp.eq.s32.totalorder 0, 0
    // Predicated region
    $region14: #{tpu_custom_call.1} parent=1 // pred_check
      %p1393 = pneg %p1392
    $region15: #{tpu_custom_call.1} parent=1 // pred_check_branch
      %1395 = sbr.rel (%p1393) target = $region17
    $region16: #{tpu_custom_call.1} parent=1 // pred_region
      %1396 = vst [vmem:[#allocation2] sm:$0x1] 0.0
      %vm1397 = vcmask 253952
      %1398 = vst.msk [vmem:[#allocation4] sm:$0x1] %vm1397, 0.0
    $region17: #{tpu_custom_call.1} parent=1 // pred_fallthru
      _
    %v1399 = vsub.f32 %v1072, %v70
    %v1400 = vsub.f32 %v1075, %v71
    %v1401 = vsub.f32 %v1078, %v72
    %v1402 = vsub.f32 %v1081, %v73
    %v1403 = vsub.f32 %v1084, %v74
    %v1404 = vsub.f32 %v1087, %v75
    %v1405 = vsub.f32 %v1090, %v76
    %v1406 = vsub.f32 %v1093, %v77
    %v1407 = vsub.f32 %v1096, %v78
    %v1408 = vsub.f32 %v1099, %v79
    %v1409 = vsub.f32 %v1102, %v80
    %v1410 = vsub.f32 %v1105, %v81
    %v1411 = vsub.f32 %v1108, %v82
    %v1412 = vsub.f32 %v1111, %v83
    %v1413 = vsub.f32 %v1114, %v84
    %v1414 = vsub.f32 %v1117, %v85
    %v1415 = vsub.f32 %v1120, %v86
    %v1416 = vsub.f32 %v1123, %v87
    %v1417 = vsub.f32 %v1126, %v88
    %v1418 = vsub.f32 %v1129, %v89
    %v1419 = vsub.f32 %v1132, %v90
    %v1420 = vsub.f32 %v1135, %v91
    %v1421 = vsub.f32 %v1138, %v92
    %v1422 = vsub.f32 %v1141, %v93
    %v1423 = vsub.f32 %v1144, %v94
    %v1424 = vsub.f32 %v1147, %v95
    %v1425 = vsub.f32 %v1150, %v96
    %v1426 = vsub.f32 %v1153, %v97
    %v1427 = vsub.f32 %v1156, %v98
    %v1428 = vsub.f32 %v1159, %v99
    %v1429 = vsub.f32 %v1162, %v100
    %v1430 = vsub.f32 %v1165, %v101
    %v1431 = vsub.f32 %v1168, %v102
    %v1432 = vsub.f32 %v1171, %v103
    %v1433 = vsub.f32 %v1174, %v104
    %v1434 = vsub.f32 %v1177, %v105
    %v1435 = vsub.f32 %v1180, %v106
    %v1436 = vsub.f32 %v1183, %v107
    %v1437 = vsub.f32 %v1186, %v108
    %v1438 = vsub.f32 %v1189, %v109
    %v1439 = vsub.f32 %v1192, %v110
    %v1440 = vsub.f32 %v1195, %v111
    %v1441 = vsub.f32 %v1198, %v112
    %v1442 = vsub.f32 %v1201, %v113
    %v1443 = vsub.f32 %v1204, %v114
    %v1444 = vsub.f32 %v1207, %v115
    %v1445 = vsub.f32 %v1210, %v116
    %v1446 = vsub.f32 %v1213, %v117
    %v1447 = vsub.f32 %v1216, %v118
    %v1448 = vsub.f32 %v1219, %v119
    %v1449 = vsub.f32 %v1222, %v120
    %v1450 = vsub.f32 %v1225, %v121
    %v1451 = vsub.f32 %v1228, %v122
    %v1452 = vsub.f32 %v1231, %v123
    %v1453 = vsub.f32 %v1234, %v124
    %v1454 = vsub.f32 %v1237, %v125
    %v1455 = vsub.f32 %v1240, %v126
    %v1456 = vsub.f32 %v1243, %v127
    %v1457 = vsub.f32 %v1246, %v128
    %v1458 = vsub.f32 %v1249, %v129
    %v1459 = vsub.f32 %v1252, %v130
    %v1460 = vsub.f32 %v1255, %v131
    %v1461 = vsub.f32 %v1258, %v132
    %v1462 = vsub.f32 %v1261, %v133
    %v1463 = vld [vmem:[#allocation2] sm:$0x1]
    %v1464 = vadd.f32 %v990, %v991
    %v1465 = vadd.f32 %v1464, %v992
    %v1466 = vadd.f32 %v1465, %v993
    %v1467 = vadd.f32 %v1466, %v994
    %v1468 = vadd.f32 %v1467, %v995
    %v1469 = vadd.f32 %v1468, %v996
    %v1470 = vadd.f32 %v1469, %v997
    %v1471 = vadd.f32 %v1470, %v998
    %v1472 = vadd.f32 %v1471, %v999
    %v1473 = vadd.f32 %v1472, %v1000
    %v1474 = vadd.f32 %v1473, %v1001
    %v1475 = vadd.f32 %v1474, %v1002
    %v1476 = vadd.f32 %v1475, %v1003
    %v1477 = vadd.f32 %v1476, %v1004
    %v1478 = vadd.f32 %v1477, %v1005
    %v1479 = vadd.f32 %v1478, %v1006
    %v1480 = vadd.f32 %v1479, %v1007
    %v1481 = vadd.f32 %v1480, %v1008
    %v1482 = vadd.f32 %v1481, %v1009
    %v1483 = vadd.f32 %v1482, %v1010
    %v1484 = vadd.f32 %v1483, %v1011
    %v1485 = vadd.f32 %v1484, %v1012
    %v1486 = vadd.f32 %v1485, %v1013
    %v1487 = vadd.f32 %v1486, %v1014
    %v1488 = vadd.f32 %v1487, %v1015
    %v1489 = vadd.f32 %v1488, %v1016
    %v1490 = vadd.f32 %v1489, %v1017
    %v1491 = vadd.f32 %v1490, %v1018
    %v1492 = vadd.f32 %v1491, %v1019
    %v1493 = vadd.f32 %v1492, %v1020
    %v1494 = vadd.f32 %v1493, %v1021
    %v1495 = vadd.f32 %v1494, %v1022
    %v1496 = vadd.f32 %v1495, %v1023
    %v1497 = vadd.f32 %v1496, %v1024
    %v1498 = vadd.f32 %v1497, %v1025
    %v1499 = vadd.f32 %v1498, %v1026
    %v1500 = vadd.f32 %v1499, %v1027
    %v1501 = vadd.f32 %v1500, %v1028
    %v1502 = vadd.f32 %v1501, %v1029
    %v1503 = vadd.f32 %v1502, %v1030
    %v1504 = vadd.f32 %v1503, %v1031
    %v1505 = vadd.f32 %v1504, %v1032
    %v1506 = vadd.f32 %v1505, %v1033
    %v1507 = vadd.f32 %v1506, %v1034
    %v1508 = vadd.f32 %v1507, %v1035
    %v1509 = vadd.f32 %v1508, %v1036
    %v1510 = vadd.f32 %v1509, %v1037
    %v1511 = vadd.f32 %v1510, %v1038
    %v1512 = vadd.f32 %v1511, %v1039
    %v1513 = vadd.f32 %v1512, %v1040
    %v1514 = vadd.f32 %v1513, %v1041
    %v1515 = vadd.f32 %v1514, %v1042
    %v1516 = vadd.f32 %v1515, %v1043
    %v1517 = vadd.f32 %v1516, %v1044
    %v1518 = vadd.f32 %v1517, %v1045
    %v1519 = vadd.f32 %v1518, %v1046
    %v1520 = vadd.f32 %v1519, %v1047
    %v1521 = vadd.f32 %v1520, %v1048
    %v1522 = vadd.f32 %v1521, %v1049
    %v1523 = vadd.f32 %v1522, %v1050
    %v1524 = vadd.f32 %v1523, %v1051
    %v1525 = vadd.f32 %v1524, %v1052
    %v1526 = vadd.f32 %v1525, %v1053
    %v1527 = vrot.slane %v1526, 4
    %v1528 = vadd.f32 %v1526, %v1527
    %v1529 = vrot.slane %v1528, 2
    %v1530 = vadd.f32 %v1528, %v1529
    %v1531 = vrot.slane %v1530, 1
    %v1532 = vadd.f32 %v1530, %v1531
    %v1533 = vadd.f32 %v1463, %v1532
    %1534 = vst [vmem:[#allocation2] sm:$0x1] %v1533
    %v1535 = vld [vmem:[#allocation4] sm:$0x1]
    %v1536 = vmul.f32 %v1399, %v1399
    %v1537 = vmul.f32 %v1400, %v1400
    %v1538 = vmul.f32 %v1401, %v1401
    %v1539 = vmul.f32 %v1402, %v1402
    %v1540 = vmul.f32 %v1403, %v1403
    %v1541 = vmul.f32 %v1404, %v1404
    %v1542 = vmul.f32 %v1405, %v1405
    %v1543 = vmul.f32 %v1406, %v1406
    %v1544 = vmul.f32 %v1407, %v1407
    %v1545 = vmul.f32 %v1408, %v1408
    %v1546 = vmul.f32 %v1409, %v1409
    %v1547 = vmul.f32 %v1410, %v1410
    %v1548 = vmul.f32 %v1411, %v1411
    %v1549 = vmul.f32 %v1412, %v1412
    %v1550 = vmul.f32 %v1413, %v1413
    %v1551 = vmul.f32 %v1414, %v1414
    %v1552 = vmul.f32 %v1415, %v1415
    %v1553 = vmul.f32 %v1416, %v1416
    %v1554 = vmul.f32 %v1417, %v1417
    %v1555 = vmul.f32 %v1418, %v1418
    %v1556 = vmul.f32 %v1419, %v1419
    %v1557 = vmul.f32 %v1420, %v1420
    %v1558 = vmul.f32 %v1421, %v1421
    %v1559 = vmul.f32 %v1422, %v1422
    %v1560 = vmul.f32 %v1423, %v1423
    %v1561 = vmul.f32 %v1424, %v1424
    %v1562 = vmul.f32 %v1425, %v1425
    %v1563 = vmul.f32 %v1426, %v1426
    %v1564 = vmul.f32 %v1427, %v1427
    %v1565 = vmul.f32 %v1428, %v1428
    %v1566 = vmul.f32 %v1429, %v1429
    %v1567 = vmul.f32 %v1430, %v1430
    %v1568 = vmul.f32 %v1431, %v1431
    %v1569 = vmul.f32 %v1432, %v1432
    %v1570 = vmul.f32 %v1433, %v1433
    %v1571 = vmul.f32 %v1434, %v1434
    %v1572 = vmul.f32 %v1435, %v1435
    %v1573 = vmul.f32 %v1436, %v1436
    %v1574 = vmul.f32 %v1437, %v1437
    %v1575 = vmul.f32 %v1438, %v1438
    %v1576 = vmul.f32 %v1439, %v1439
    %v1577 = vmul.f32 %v1440, %v1440
    %v1578 = vmul.f32 %v1441, %v1441
    %v1579 = vmul.f32 %v1442, %v1442
    %v1580 = vmul.f32 %v1443, %v1443
    %v1581 = vmul.f32 %v1444, %v1444
    %v1582 = vmul.f32 %v1445, %v1445
    %v1583 = vmul.f32 %v1446, %v1446
    %v1584 = vmul.f32 %v1447, %v1447
    %v1585 = vmul.f32 %v1448, %v1448
    %v1586 = vmul.f32 %v1449, %v1449
    %v1587 = vmul.f32 %v1450, %v1450
    %v1588 = vmul.f32 %v1451, %v1451
    %v1589 = vmul.f32 %v1452, %v1452
    %v1590 = vmul.f32 %v1453, %v1453
    %v1591 = vmul.f32 %v1454, %v1454
    %v1592 = vmul.f32 %v1455, %v1455
    %v1593 = vmul.f32 %v1456, %v1456
    %v1594 = vmul.f32 %v1457, %v1457
    %v1595 = vmul.f32 %v1458, %v1458
    %v1596 = vmul.f32 %v1459, %v1459
    %v1597 = vmul.f32 %v1460, %v1460
    %v1598 = vmul.f32 %v1461, %v1461
    %v1599 = vmul.f32 %v1462, %v1462
    %v1600 = vsel %vm151, %v1536, 0.0
    %v1601 = vsel %vm151, %v1537, 0.0
    %v1602 = vadd.f32 %v1600, %v1601
    %v1603 = vsel %vm151, %v1538, 0.0
    %v1604 = vadd.f32 %v1602, %v1603
    %v1605 = vsel %vm151, %v1539, 0.0
    %v1606 = vadd.f32 %v1604, %v1605
    %v1607 = vsel %vm151, %v1540, 0.0
    %v1608 = vadd.f32 %v1606, %v1607
    %v1609 = vsel %vm151, %v1541, 0.0
    %v1610 = vadd.f32 %v1608, %v1609
    %v1611 = vsel %vm151, %v1542, 0.0
    %v1612 = vadd.f32 %v1610, %v1611
    %v1613 = vsel %vm151, %v1543, 0.0
    %v1614 = vadd.f32 %v1612, %v1613
    %v1615 = vsel %vm151, %v1544, 0.0
    %v1616 = vadd.f32 %v1614, %v1615
    %v1617 = vsel %vm151, %v1545, 0.0
    %v1618 = vadd.f32 %v1616, %v1617
    %v1619 = vsel %vm151, %v1546, 0.0
    %v1620 = vadd.f32 %v1618, %v1619
    %v1621 = vsel %vm151, %v1547, 0.0
    %v1622 = vadd.f32 %v1620, %v1621
    %v1623 = vsel %vm151, %v1548, 0.0
    %v1624 = vadd.f32 %v1622, %v1623
    %v1625 = vsel %vm151, %v1549, 0.0
    %v1626 = vadd.f32 %v1624, %v1625
    %v1627 = vsel %vm151, %v1550, 0.0
    %v1628 = vadd.f32 %v1626, %v1627
    %v1629 = vsel %vm151, %v1551, 0.0
    %v1630 = vadd.f32 %v1628, %v1629
    %v1631 = vsel %vm151, %v1552, 0.0
    %v1632 = vadd.f32 %v1630, %v1631
    %v1633 = vsel %vm151, %v1553, 0.0
    %v1634 = vadd.f32 %v1632, %v1633
    %v1635 = vsel %vm151, %v1554, 0.0
    %v1636 = vadd.f32 %v1634, %v1635
    %v1637 = vsel %vm151, %v1555, 0.0
    %v1638 = vadd.f32 %v1636, %v1637
    %v1639 = vsel %vm151, %v1556, 0.0
    %v1640 = vadd.f32 %v1638, %v1639
    %v1641 = vsel %vm151, %v1557, 0.0
    %v1642 = vadd.f32 %v1640, %v1641
    %v1643 = vsel %vm151, %v1558, 0.0
    %v1644 = vadd.f32 %v1642, %v1643
    %v1645 = vsel %vm151, %v1559, 0.0
    %v1646 = vadd.f32 %v1644, %v1645
    %v1647 = vsel %vm151, %v1560, 0.0
    %v1648 = vadd.f32 %v1646, %v1647
    %v1649 = vsel %vm151, %v1561, 0.0
    %v1650 = vadd.f32 %v1648, %v1649
    %v1651 = vsel %vm151, %v1562, 0.0
    %v1652 = vadd.f32 %v1650, %v1651
    %v1653 = vsel %vm151, %v1563, 0.0
    %v1654 = vadd.f32 %v1652, %v1653
    %v1655 = vsel %vm151, %v1564, 0.0
    %v1656 = vadd.f32 %v1654, %v1655
    %v1657 = vsel %vm151, %v1565, 0.0
    %v1658 = vadd.f32 %v1656, %v1657
    %v1659 = vsel %vm151, %v1566, 0.0
    %v1660 = vadd.f32 %v1658, %v1659
    %v1661 = vsel %vm151, %v1567, 0.0
    %v1662 = vadd.f32 %v1660, %v1661
    %v1663 = vsel %vm151, %v1568, 0.0
    %v1664 = vadd.f32 %v1662, %v1663
    %v1665 = vsel %vm151, %v1569, 0.0
    %v1666 = vadd.f32 %v1664, %v1665
    %v1667 = vsel %vm151, %v1570, 0.0
    %v1668 = vadd.f32 %v1666, %v1667
    %v1669 = vsel %vm151, %v1571, 0.0
    %v1670 = vadd.f32 %v1668, %v1669
    %v1671 = vsel %vm151, %v1572, 0.0
    %v1672 = vadd.f32 %v1670, %v1671
    %v1673 = vsel %vm151, %v1573, 0.0
    %v1674 = vadd.f32 %v1672, %v1673
    %v1675 = vsel %vm151, %v1574, 0.0
    %v1676 = vadd.f32 %v1674, %v1675
    %v1677 = vsel %vm151, %v1575, 0.0
    %v1678 = vadd.f32 %v1676, %v1677
    %v1679 = vsel %vm151, %v1576, 0.0
    %v1680 = vadd.f32 %v1678, %v1679
    %v1681 = vsel %vm151, %v1577, 0.0
    %v1682 = vadd.f32 %v1680, %v1681
    %v1683 = vsel %vm151, %v1578, 0.0
    %v1684 = vadd.f32 %v1682, %v1683
    %v1685 = vsel %vm151, %v1579, 0.0
    %v1686 = vadd.f32 %v1684, %v1685
    %v1687 = vsel %vm151, %v1580, 0.0
    %v1688 = vadd.f32 %v1686, %v1687
    %v1689 = vsel %vm151, %v1581, 0.0
    %v1690 = vadd.f32 %v1688, %v1689
    %v1691 = vsel %vm151, %v1582, 0.0
    %v1692 = vadd.f32 %v1690, %v1691
    %v1693 = vsel %vm151, %v1583, 0.0
    %v1694 = vadd.f32 %v1692, %v1693
    %v1695 = vsel %vm151, %v1584, 0.0
    %v1696 = vadd.f32 %v1694, %v1695
    %v1697 = vsel %vm151, %v1585, 0.0
    %v1698 = vadd.f32 %v1696, %v1697
    %v1699 = vsel %vm151, %v1586, 0.0
    %v1700 = vadd.f32 %v1698, %v1699
    %v1701 = vsel %vm151, %v1587, 0.0
    %v1702 = vadd.f32 %v1700, %v1701
    %v1703 = vsel %vm151, %v1588, 0.0
    %v1704 = vadd.f32 %v1702, %v1703
    %v1705 = vsel %vm151, %v1589, 0.0
    %v1706 = vadd.f32 %v1704, %v1705
    %v1707 = vsel %vm151, %v1590, 0.0
    %v1708 = vadd.f32 %v1706, %v1707
    %v1709 = vsel %vm151, %v1591, 0.0
    %v1710 = vadd.f32 %v1708, %v1709
    %v1711 = vsel %vm151, %v1592, 0.0
    %v1712 = vadd.f32 %v1710, %v1711
    %v1713 = vsel %vm151, %v1593, 0.0
    %v1714 = vadd.f32 %v1712, %v1713
    %v1715 = vsel %vm151, %v1594, 0.0
    %v1716 = vadd.f32 %v1714, %v1715
    %v1717 = vsel %vm151, %v1595, 0.0
    %v1718 = vadd.f32 %v1716, %v1717
    %v1719 = vsel %vm151, %v1596, 0.0
    %v1720 = vadd.f32 %v1718, %v1719
    %v1721 = vsel %vm151, %v1597, 0.0
    %v1722 = vadd.f32 %v1720, %v1721
    %v1723 = vsel %vm151, %v1598, 0.0
    %v1724 = vadd.f32 %v1722, %v1723
    %v1725 = vsel %vm151, %v1599, 0.0
    %v1726 = vadd.f32 %v1724, %v1725
    %v1727 = vrot.slane %v1726, 4
    %v1728 = vadd.f32 %v1726, %v1727
    %v1729 = vrot.slane %v1728, 2
    %v1730 = vadd.f32 %v1728, %v1729
    %v1731 = vrot.slane %v1730, 1
    %v1732 = vadd.f32 %v1730, %v1731
    %v1733 = vadd.f32 %v1535, %v1732
    %vm1734 = vcmask 253952
    %1735 = vst.msk [vmem:[#allocation4] sm:$0x1] %vm1734, %v1733
    %s1736 = sadd.s32 0, 0
    %s1737 = smul.u32 64, %s1736
    %p1738 = scmp.lt.s32.totalorder %s1737, 63
    %s1739 = scalar_select %p1738, %s1737, 63
    %s1740 = smul.addr %s1739, 8
    %s1741 = scalar_lea.vmem %s3, %s1740
    %s1742 = sadd.s32 0, 0
    %s1743 = smul.u32 64, %s1742
    %p1744 = scmp.lt.s32.totalorder %s1743, 63
    %s1745 = scalar_select %p1744, %s1743, 63
    %s1746 = smul.addr %s1745, 8
    %s1747 = scalar_lea.vmem %s4, %s1746
    // Predicated region
    $region18: #{tpu_custom_call.1} parent=1 // pred_check
      _
    $region19: #{tpu_custom_call.1} parent=1 // pred_check_branch
      %1749 = sbr.rel (0) target = $region21
    $region20: #{tpu_custom_call.1} parent=1 // pred_region
      %s1750 = sadd.s32 0, 0
      %s1751 = smul.u32 64, %s1750
    $region21: #{tpu_custom_call.1} parent=1 // pred_fallthru
      _
    // Predicated region
    $region22: #{tpu_custom_call.1} parent=1 // pred_check
      _
    $region23: #{tpu_custom_call.1} parent=1 // pred_check_branch
      %1753 = sbr.rel (0) target = $region25
    $region24: #{tpu_custom_call.1} parent=1 // pred_region
      %s1754 = sadd.s32 0, 0
      %s1755 = smul.u32 64, %s1754
    $region25: #{tpu_custom_call.1} parent=1 // pred_fallthru
      _
    // Predicated region
    $region26: #{tpu_custom_call.1} parent=1 // pred_check
      _
    $region27: #{tpu_custom_call.1} parent=1 // pred_check_branch
      %1757 = sbr.rel (0) target = $region29
    $region28: #{tpu_custom_call.1} parent=1 // pred_region
      %1759 = vsyncadd [#allocation3], 0
      %s1761 = sshll.u32 [#allocation2], 4
      %s1762 = int_to_ptr.vmem [resolvable:$true] %s1761
      %s1763 = sshll.u32 %s5, 4
      %s1764 = int_to_ptr.hbm [resolvable:$true] %s1763
      %1766 = dma.vmem_to_hbm [thread:$0]  %s1762, 16, %s1764, [#allocation3]
    $region29: #{tpu_custom_call.1} parent=1 // pred_fallthru
      _
    // Predicated region
    $region30: #{tpu_custom_call.1} parent=1 // pred_check
      _
    $region31: #{tpu_custom_call.1} parent=1 // pred_check_branch
      %1768 = sbr.rel (0) target = $region33
    $region32: #{tpu_custom_call.1} parent=1 // pred_region
      %1770 = vsyncadd [#allocation5], 0
      %s1772 = sshll.u32 [#allocation4], 4
      %s1773 = int_to_ptr.vmem [resolvable:$true] %s1772
      %s1774 = sshll.u32 %s6, 4
      %s1775 = int_to_ptr.hbm [resolvable:$true] %s1774
      %1777 = dma.vmem_to_hbm [thread:$0]  %s1773, 16, %s1775, [#allocation5]
    $region33: #{tpu_custom_call.1} parent=1 // pred_fallthru
      _
    // Predicated region
    $region34: #{tpu_custom_call.1} parent=1 // pred_check
      _
    $region35: #{tpu_custom_call.1} parent=1 // pred_check_branch
      %1779 = sbr.rel (0) target = $region37
    $region36: #{tpu_custom_call.1} parent=1 // pred_region
      %s1780 = sadd.s32 0, 0
      %s1781 = smul.u32 64, %s1780
      %p1782 = scmp.lt.s32.totalorder %s1781, 63
      %s1783 = scalar_select %p1782, %s1781, 63
      %s1784 = smul.addr %s1783, 8
      %s1785 = scalar_lea.vmem %s3, %s1784
    $region37: #{tpu_custom_call.1} parent=1 // pred_fallthru
      _
    // Predicated region
    $region38: #{tpu_custom_call.1} parent=1 // pred_check
      _
    $region39: #{tpu_custom_call.1} parent=1 // pred_check_branch
      %1787 = sbr.rel (0) target = $region41
    $region40: #{tpu_custom_call.1} parent=1 // pred_region
      %s1788 = sadd.s32 0, 0
      %s1789 = smul.u32 64, %s1788
      %p1790 = scmp.lt.s32.totalorder %s1789, 63
      %s1791 = scalar_select %p1790, %s1789, 63
      %s1792 = smul.addr %s1791, 8
      %s1793 = scalar_lea.vmem %s4, %s1792
    $region41: #{tpu_custom_call.1} parent=1 // pred_fallthru
      _
    // Predicated region
    $region42: #{tpu_custom_call.1} parent=1 // pred_check
      _
    $region43: #{tpu_custom_call.1} parent=1 // pred_check_branch
      %1795 = sbr.rel (0) target = $region45
    $region44: #{tpu_custom_call.1} parent=1 // pred_region
      %1797 = dma.done [#allocation3], 16
    $region45: #{tpu_custom_call.1} parent=1 // pred_fallthru
      _
    // Predicated region
    $region46: #{tpu_custom_call.1} parent=1 // pred_check
      _
    $region47: #{tpu_custom_call.1} parent=1 // pred_check_branch
      %1799 = sbr.rel (0) target = $region49
    $region48: #{tpu_custom_call.1} parent=1 // pred_region
      %1801 = dma.done [#allocation5], 16
    $region49: #{tpu_custom_call.1} parent=1 // pred_fallthru
      _
    %1802 = vsyncpa [#allocation3], 1
    %1803 = vsyncpa [#allocation5], 1

</llo_original>
